<compile_context>
chip_gen: v7x
topology: tpu7x:2x2x1
jax: 0.10.0
libtpu: 0.0.40
codegen_flags: <defaults>
</compile_context>

<pallas_src>
import functools

import jax
import jax.numpy as jnp
from jax.experimental import pallas as pl
from jax.experimental.pallas import tpu as pltpu


def _rnn_gate_seq_kernel(input_dim, hidden_dim,
                         x_ref, hc0_ref, w_ref, wp_ref, bp_ref,
                         prob_ref, hc_ref,
                         h_sc, c_sc):
    D, H = input_dim, hidden_dim

    # Load the initial recurrent state into VMEM scratch on the first step.
    @pl.when(pl.program_id(0) == 0)
    def _():
        h_sc[...] = hc0_ref[0]
        c_sc[...] = hc0_ref[1]

    x = x_ref[...]            # (B, D)   current timestep
    h = h_sc[...]             # (B, H)   resident recurrent state
    c = c_sc[...]

    # gates = x @ W_ih^T + h @ W_hh^T + (b_ih + b_hh)
    # W_ih^T, W_hh^T and the summed bias are packed as rows of one VMEM-
    # resident weight array (DMA'd once per sequence).  Gate order [i,f,g,o].
    hp = jax.lax.Precision.HIGHEST
    gates = (jnp.dot(x, w_ref[0:D, :],
                     preferred_element_type=jnp.float32, precision=hp)
             + jnp.dot(h, w_ref[D:D + H, :],
                       preferred_element_type=jnp.float32, precision=hp)
             + w_ref[D + H:D + H + 1, :])                 # bias row, (1, 4H)

    # Two full-vreg EUP passes over the 4H-lane gates; slice gate blocks after.
    sig = jax.nn.sigmoid(gates)
    th = jnp.tanh(gates)
    i_g = sig[:, 0:H]
    f_g = sig[:, H:2 * H]
    g_g = th[:, 2 * H:3 * H]
    o_g = sig[:, 3 * H:4 * H]

    c_new = f_g * c + i_g * g_g
    h_new = o_g * jnp.tanh(c_new)

    # Keep state resident for the next grid step; the constant-index output
    # block is only written back to HBM once, after the last step.
    h_sc[...] = h_new
    c_sc[...] = c_new
    hc_ref[0] = h_new
    hc_ref[1] = c_new

    # N=1 projection as VPU multiply + lane reduce (no degenerate MXU pass);
    # b_proj read as a scalar from SMEM.
    proj = jnp.sum(h_new * wp_ref[...], axis=-1, keepdims=True) + bp_ref[0, 0]
    prob = jax.nn.sigmoid(proj)                           # (B, 1)
    disc = (prob > 0.5).astype(jnp.float32)               # straight-through fwd

    # Lane-dense per-step output slab: lane 0 = prob, lane 1 = disc, rest 0.
    lane = jax.lax.broadcasted_iota(jnp.int32, (prob.shape[0], 128), 1)
    prob_ref[...] = jnp.where(lane == 0, prob, jnp.where(lane == 1, disc, 0.0))


def pack_rnn_gate_params(w_ih_t, w_hh_t, b_ih, b_hh, w_proj, b_proj):
    """One-time parameter prep (do NOT repeat per call).

    w_ih_t: (D, 4H), w_hh_t: (H, 4H)  -- transposed PyTorch LSTM weights,
    gate order [i, f, g, o];  b_ih / b_hh: (1, 4H);  w_proj: (H, 1);
    b_proj: (1, 1).
    """
    w_aug = jnp.concatenate(
        [w_ih_t, w_hh_t, (b_ih + b_hh).reshape(1, -1)],
        axis=0).astype(jnp.float32)                       # (D + H + 1, 4H)
    w_proj_row = w_proj.reshape(1, -1).astype(jnp.float32)  # (1, H)
    b_proj_p = jnp.asarray(b_proj, jnp.float32).reshape(1, 1)
    return w_aug, w_proj_row, b_proj_p


@jax.jit
def rnn_gate_sequence(x_seq, hc0, w_aug, w_proj_row, b_proj):
    """T fused gate invocations.

    x_seq: (T, B, D);  hc0: (2, B, H) packed [h0; c0] initial state.
    Returns (disc [T,B,1,1,1], prob [T,B,1], hc_new [2,B,H]).
    """
    T, B, D = x_seq.shape
    H = hc0.shape[2]

    kernel = functools.partial(_rnn_gate_seq_kernel, D, H)

    prob_slab, hc_out = pl.pallas_call(
        kernel,
        out_shape=(
            jax.ShapeDtypeStruct((T, B, 128), jnp.float32),   # per-step slab
            jax.ShapeDtypeStruct((2, B, H), jnp.float32),     # final [h; c]
        ),
        grid_spec=pltpu.PrefetchScalarGridSpec(
            num_scalar_prefetch=0,
            grid=(T,),
            in_specs=[
                pl.BlockSpec((None, B, D), lambda t: (t, 0, 0)),      # x_t
                pl.BlockSpec((2, B, H), lambda t: (0, 0, 0)),         # hc0
                pl.BlockSpec((D + H + 1, 4 * H), lambda t: (0, 0)),   # W + bias
                pl.BlockSpec((1, H), lambda t: (0, 0)),               # w_proj row
                pl.BlockSpec(memory_space=pltpu.MemorySpace.SMEM),    # b_proj
            ],
            out_specs=[
                pl.BlockSpec((None, B, 128), lambda t: (t, 0, 0)),    # slab
                pl.BlockSpec((2, B, H), lambda t: (0, 0, 0)),         # state
            ],
            scratch_shapes=[pltpu.VMEM((B, H), jnp.float32),          # h
                            pltpu.VMEM((B, H), jnp.float32)],         # c
        ),
        compiler_params=pltpu.CompilerParams(
            dimension_semantics=("arbitrary",)),   # recurrence is sequential
    )(x_seq, hc0, w_aug, w_proj_row, b_proj)

    prob = prob_slab[:, :, 0:1]                                # (T, B, 1)
    disc = prob_slab[:, :, 1:2].reshape(T, B, 1, 1, 1)         # (T, B, 1, 1, 1)
    return disc, prob, hc_out


def rnn_gate_forward(x, hc, w_aug, w_proj_row, b_proj):
    """Module-faithful single gate call (one LSTM step).

    Returns (disc_prob [B,1,1,1], prob [B,1], hc_new [2,B,H]).
    """
    # TODO(synk): the straight-through gradient routing
    # (hard - stop_gradient(prob) + prob) needs a custom_vjp before training
    # use; this is a forward-only kernel (forward value == hard threshold).
    disc, prob, hc_new = rnn_gate_sequence(x[None], hc, w_aug, w_proj_row, b_proj)
    return disc[0], prob[0], hc_new


def _reference_step(x, h0, c0, w_ih_t, w_hh_t, b_ih, b_hh, w_proj, b_proj):
    """Pure-JAX reference matching the PyTorch module (unfused weights)."""
    H = h0.shape[1]
    hp = jax.lax.Precision.HIGHEST
    gates = (jnp.dot(x, w_ih_t, precision=hp)
             + jnp.dot(h0, w_hh_t, precision=hp) + b_ih + b_hh)
    i_g = jax.nn.sigmoid(gates[:, 0:H])
    f_g = jax.nn.sigmoid(gates[:, H:2 * H])
    g_g = jnp.tanh(gates[:, 2 * H:3 * H])
    o_g = jax.nn.sigmoid(gates[:, 3 * H:4 * H])
    c_new = f_g * c0 + i_g * g_g
    h_new = o_g * jnp.tanh(c_new)
    prob = jax.nn.sigmoid(jnp.dot(h_new, w_proj, precision=hp) + b_proj)
    disc = (prob > 0.5).astype(jnp.float32).reshape(x.shape[0], 1, 1, 1)
    return disc, prob, h_new, c_new


if __name__ == "__main__":
    batch = 2
    input_dim = 16
    hidden_dim = 32
    seq_len = 3   # gate invocations fused into one gridded kernel call

    key = jax.random.PRNGKey(0)
    kx, kx1, k1, k2, k3, k4, k5, k6 = jax.random.split(key, 8)

    # Deterministic parameter init, matching PyTorch's U(-1/sqrt(H), 1/sqrt(H)).
    ks = 1.0 / jnp.sqrt(jnp.float32(hidden_dim))
    w_ih_t = jax.random.uniform(k1, (input_dim, 4 * hidden_dim), jnp.float32, -ks, ks)
    w_hh_t = jax.random.uniform(k2, (hidden_dim, 4 * hidden_dim), jnp.float32, -ks, ks)
    b_ih = jax.random.uniform(k3, (1, 4 * hidden_dim), jnp.float32, -ks, ks)
    b_hh = jax.random.uniform(k4, (1, 4 * hidden_dim), jnp.float32, -ks, ks)
    w_proj = jax.random.uniform(k5, (hidden_dim, 1), jnp.float32, -ks, ks)
    b_proj = jax.random.uniform(k6, (1, 1), jnp.float32, -ks, ks)

    # One-time parameter packing (weights + summed gate bias, proj row, proj bias).
    w_aug, w_proj_row, b_proj_p = pack_rnn_gate_params(
        w_ih_t, w_hh_t, b_ih, b_hh, w_proj, b_proj)

    # Sequence of gate calls (the PyTorch module carries recurrent state across
    # calls; first call has self.hidden = None -> zero initial LSTM state).
    x_seq = jax.random.normal(kx, (seq_len, batch, input_dim), jnp.float32)
    hc0 = jnp.zeros((2, batch, hidden_dim), jnp.float32)

    disc_seq, prob_seq, hc = rnn_gate_sequence(x_seq, hc0, w_aug, w_proj_row, b_proj_p)

    # One more single-step (module-faithful) call, continuing the carried state.
    x_last = jax.random.normal(kx1, (batch, input_dim), jnp.float32)
    disc1, prob1, hc = rnn_gate_forward(x_last, hc, w_aug, w_proj_row, b_proj_p)
    jax.block_until_ready((disc_seq, prob_seq, disc1, prob1, hc))

    # Pure-JAX reference (unfused weights, per-step loop).
    h_r = jnp.zeros((batch, hidden_dim), jnp.float32)
    c_r = jnp.zeros((batch, hidden_dim), jnp.float32)
    for t in range(seq_len):
        d_r, p_r, h_r, c_r = _reference_step(
            x_seq[t], h_r, c_r, w_ih_t, w_hh_t, b_ih, b_hh, w_proj, b_proj)
        assert prob_seq[t].shape == (batch, 1)
        assert disc_seq[t].shape == (batch, 1, 1, 1)
        assert jnp.allclose(prob_seq[t], p_r, atol=1e-5)
        assert jnp.allclose(disc_seq[t], d_r)
    d_r, p_r, h_r, c_r = _reference_step(
        x_last, h_r, c_r, w_ih_t, w_hh_t, b_ih, b_hh, w_proj, b_proj)
    assert prob1.shape == (batch, 1) and disc1.shape == (batch, 1, 1, 1)
    assert jnp.allclose(prob1, p_r, atol=1e-5)
    assert jnp.allclose(disc1, d_r)
    assert jnp.allclose(hc[0], h_r, atol=1e-5)
    assert jnp.allclose(hc[1], c_r, atol=1e-5)

    print("KERNEL_OK")
</pallas_src>

<mosaic_0001>
module attributes {stable_mosaic.version = 11 : i64} {
  func.func @_rnn_gate_seq_kernel(%arg0: i32, %arg1: memref<1x2x16xf32, #tpu.memory_space<vmem>>, %arg2: memref<2x2x32xf32, #tpu.memory_space<vmem>>, %arg3: memref<49x128xf32, #tpu.memory_space<vmem>>, %arg4: memref<1x32xf32, #tpu.memory_space<vmem>>, %arg5: memref<1x1xf32, #tpu.memory_space<smem>>, %arg6: memref<1x2x128xf32, #tpu.memory_space<vmem>>, %arg7: memref<2x2x32xf32, #tpu.memory_space<vmem>>, %arg8: memref<2x32xf32, #tpu.memory_space<vmem>>, %arg9: memref<2x32xf32, #tpu.memory_space<vmem>>) attributes {dimension_semantics = [#tpu.dimension_semantics<arbitrary>], iteration_bounds = array<i64: 3>, scalar_prefetch = 0 : i64, scratch_operands = 2 : i64, tpu.core_type = #tpu.core_type<tc>, window_params = [{transform_indices = @transform_0, window_bounds = array<i64: 1, 2, 16>}, {pipeline_mode = #tpu.pipeline_mode<synchronous>, transform_indices = @transform_1, window_bounds = array<i64: 2, 2, 32>}, {pipeline_mode = #tpu.pipeline_mode<synchronous>, transform_indices = @transform_2, window_bounds = array<i64: 49, 128>}, {pipeline_mode = #tpu.pipeline_mode<synchronous>, transform_indices = @transform_3, window_bounds = array<i64: 1, 32>}, {transform_indices = @transform_4, window_bounds = array<i64: 1, 1>}, {transform_indices = @transform_5, window_bounds = array<i64: 1, 2, 128>}, {pipeline_mode = #tpu.pipeline_mode<synchronous>, transform_indices = @transform_6, window_bounds = array<i64: 2, 2, 32>}]} {
    %c0_i32 = arith.constant 0 : i32
    %0 = arith.cmpi eq, %arg0, %c0_i32 : i32
    %1 = arith.extui %0 : i1 to i32
    %c0_i32_0 = arith.constant 0 : i32
    %2 = arith.cmpi ne, %1, %c0_i32_0 : i32
    scf.if %2 {
      %c0_34 = arith.constant 0 : index
      %c0_35 = arith.constant 0 : index
      %c0_36 = arith.constant 0 : index
      %70 = vector.load %arg2[%c0_34, %c0_35, %c0_36] : memref<2x2x32xf32, #tpu.memory_space<vmem>>, vector<1x2x32xf32>
      %71 = vector.shape_cast %70 : vector<1x2x32xf32> to vector<2x32xf32>
      %c0_37 = arith.constant 0 : index
      %c0_38 = arith.constant 0 : index
      %72 = vector.load %arg8[%c0_37, %c0_38] : memref<2x32xf32, #tpu.memory_space<vmem>>, vector<2x32xf32>
      tpu.vector_store %arg8[%c0_37, %c0_38], %71 {strides = array<i32>} : memref<2x32xf32, #tpu.memory_space<vmem>>, vector<2x32xf32>,
      %c1_39 = arith.constant 1 : index
      %c0_40 = arith.constant 0 : index
      %c0_41 = arith.constant 0 : index
      %73 = vector.load %arg2[%c1_39, %c0_40, %c0_41] : memref<2x2x32xf32, #tpu.memory_space<vmem>>, vector<1x2x32xf32>
      %74 = vector.shape_cast %73 : vector<1x2x32xf32> to vector<2x32xf32>
      %c0_42 = arith.constant 0 : index
      %c0_43 = arith.constant 0 : index
      %75 = vector.load %arg9[%c0_42, %c0_43] : memref<2x32xf32, #tpu.memory_space<vmem>>, vector<2x32xf32>
      tpu.vector_store %arg9[%c0_42, %c0_43], %74 {strides = array<i32>} : memref<2x32xf32, #tpu.memory_space<vmem>>, vector<2x32xf32>,
    } else {
    }
    %c0 = arith.constant 0 : index
    %c0_1 = arith.constant 0 : index
    %c0_2 = arith.constant 0 : index
    %3 = vector.load %arg1[%c0, %c0_1, %c0_2] : memref<1x2x16xf32, #tpu.memory_space<vmem>>, vector<1x2x16xf32>
    %4 = vector.shape_cast %3 : vector<1x2x16xf32> to vector<2x16xf32>
    %c0_3 = arith.constant 0 : index
    %c0_4 = arith.constant 0 : index
    %5 = vector.load %arg8[%c0_3, %c0_4] : memref<2x32xf32, #tpu.memory_space<vmem>>, vector<2x32xf32>
    %c0_5 = arith.constant 0 : index
    %c0_6 = arith.constant 0 : index
    %6 = vector.load %arg9[%c0_5, %c0_6] : memref<2x32xf32, #tpu.memory_space<vmem>>, vector<2x32xf32>
    %c0_7 = arith.constant 0 : index
    %c0_8 = arith.constant 0 : index
    %7 = vector.load %arg3[%c0_7, %c0_8] : memref<49x128xf32, #tpu.memory_space<vmem>>, vector<16x128xf32>
    %cst = arith.constant dense<0.000000e+00> : vector<2x128xf32>
    %8 = tpu.matmul %4, %7, %cst {dimension_numbers = #tpu.dot_dimension_numbers<[1], [0], [0], [1], [0, 0, 1, 1], [], []>, precision = #tpu.contract_precision<fp32>} : vector<2x16xf32>, vector<16x128xf32>, vector<2x128xf32> -> vector<2x128xf32>
    %c16 = arith.constant 16 : index
    %c0_9 = arith.constant 0 : index
    %9 = vector.load %arg3[%c16, %c0_9] : memref<49x128xf32, #tpu.memory_space<vmem>>, vector<32x128xf32>
    %cst_10 = arith.constant dense<0.000000e+00> : vector<2x128xf32>
    %10 = tpu.matmul %5, %9, %cst_10 {dimension_numbers = #tpu.dot_dimension_numbers<[1], [0], [0], [1], [0, 0, 1, 1], [], []>, precision = #tpu.contract_precision<fp32>} : vector<2x32xf32>, vector<32x128xf32>, vector<2x128xf32> -> vector<2x128xf32>
    %11 = arith.addf %8, %10 : vector<2x128xf32>
    %c48 = arith.constant 48 : index
    %c0_11 = arith.constant 0 : index
    %12 = vector.load %arg3[%c48, %c0_11] : memref<49x128xf32, #tpu.memory_space<vmem>>, vector<1x128xf32>
    %13 = vector.broadcast %12 : vector<1x128xf32> to vector<2x128xf32>
    %14 = arith.addf %11, %13 : vector<2x128xf32>
    %15 = arith.negf %14 : vector<2x128xf32>
    %16 = math.exp %15 : vector<2x128xf32>
    %cst_12 = arith.constant 1.000000e+00 : f32
    %17 = vector.broadcast %cst_12 : f32 to vector<2x128xf32>
    %18 = arith.addf %17, %16 : vector<2x128xf32>
    %19 = arith.divf %17, %18 : vector<2x128xf32>
    %20 = math.tanh %14 : vector<2x128xf32>
    %21 = vector.extract_strided_slice %19 {offsets = [0, 0], sizes = [2, 32], strides = [1, 1]} : vector<2x128xf32> to vector<2x32xf32>
    %22 = vector.extract_strided_slice %19 {offsets = [0, 32], sizes = [2, 32], strides = [1, 1]} : vector<2x128xf32> to vector<2x32xf32>
    %23 = vector.extract_strided_slice %20 {offsets = [0, 64], sizes = [2, 32], strides = [1, 1]} : vector<2x128xf32> to vector<2x32xf32>
    %24 = vector.extract_strided_slice %19 {offsets = [0, 96], sizes = [2, 32], strides = [1, 1]} : vector<2x128xf32> to vector<2x32xf32>
    %25 = arith.mulf %22, %6 : vector<2x32xf32>
    %26 = arith.mulf %21, %23 : vector<2x32xf32>
    %27 = arith.addf %25, %26 : vector<2x32xf32>
    %28 = math.tanh %27 : vector<2x32xf32>
    %29 = arith.mulf %24, %28 : vector<2x32xf32>
    %c0_13 = arith.constant 0 : index
    %c0_14 = arith.constant 0 : index
    %30 = vector.load %arg8[%c0_13, %c0_14] : memref<2x32xf32, #tpu.memory_space<vmem>>, vector<2x32xf32>
    tpu.vector_store %arg8[%c0_13, %c0_14], %29 {strides = array<i32>} : memref<2x32xf32, #tpu.memory_space<vmem>>, vector<2x32xf32>,
    %c0_15 = arith.constant 0 : index
    %c0_16 = arith.constant 0 : index
    %31 = vector.load %arg9[%c0_15, %c0_16] : memref<2x32xf32, #tpu.memory_space<vmem>>, vector<2x32xf32>
    tpu.vector_store %arg9[%c0_15, %c0_16], %27 {strides = array<i32>} : memref<2x32xf32, #tpu.memory_space<vmem>>, vector<2x32xf32>,
    %c0_17 = arith.constant 0 : index
    %c0_18 = arith.constant 0 : index
    %c0_19 = arith.constant 0 : index
    %32 = vector.load %arg7[%c0_17, %c0_18, %c0_19] : memref<2x2x32xf32, #tpu.memory_space<vmem>>, vector<1x2x32xf32>
    %33 = vector.shape_cast %32 : vector<1x2x32xf32> to vector<2x32xf32>
    %34 = vector.shape_cast %29 : vector<2x32xf32> to vector<1x2x32xf32>
    tpu.vector_store %arg7[%c0_17, %c0_18, %c0_19], %34 {strides = array<i32>} : memref<2x2x32xf32, #tpu.memory_space<vmem>>, vector<1x2x32xf32>,
    %c1 = arith.constant 1 : index
    %c0_20 = arith.constant 0 : index
    %c0_21 = arith.constant 0 : index
    %35 = vector.load %arg7[%c1, %c0_20, %c0_21] : memref<2x2x32xf32, #tpu.memory_space<vmem>>, vector<1x2x32xf32>
    %36 = vector.shape_cast %35 : vector<1x2x32xf32> to vector<2x32xf32>
    %37 = vector.shape_cast %27 : vector<2x32xf32> to vector<1x2x32xf32>
    tpu.vector_store %arg7[%c1, %c0_20, %c0_21], %37 {strides = array<i32>} : memref<2x2x32xf32, #tpu.memory_space<vmem>>, vector<1x2x32xf32>,
    %c0_22 = arith.constant 0 : index
    %c0_23 = arith.constant 0 : index
    %38 = vector.load %arg4[%c0_22, %c0_23] : memref<1x32xf32, #tpu.memory_space<vmem>>, vector<1x32xf32>
    %39 = vector.broadcast %38 : vector<1x32xf32> to vector<2x32xf32>
    %40 = arith.mulf %29, %39 : vector<2x32xf32>
    %cst_24 = arith.constant dense<0.000000e+00> : vector<2xf32>
    %41 = vector.multi_reduction <add>, %40, %cst_24 [1] : vector<2x32xf32> to vector<2xf32>
    %42 = vector.shape_cast %41 : vector<2xf32> to vector<2x1xf32>
    %c0_25 = arith.constant 0 : index
    %c0_26 = arith.constant 0 : index
    %43 = memref.load %arg5[%c0_25, %c0_26] : memref<1x1xf32, #tpu.memory_space<smem>>
    %44 = vector.broadcast %43 : f32 to vector<2x1xf32>
    %45 = arith.addf %42, %44 : vector<2x1xf32>
    %46 = arith.negf %45 : vector<2x1xf32>
    %47 = math.exp %46 : vector<2x1xf32>
    %cst_27 = arith.constant 1.000000e+00 : f32
    %48 = vector.broadcast %cst_27 : f32 to vector<2x1xf32>
    %49 = arith.addf %48, %47 : vector<2x1xf32>
    %50 = arith.divf %48, %49 : vector<2x1xf32>
    %cst_28 = arith.constant 5.000000e-01 : f32
    %51 = vector.broadcast %cst_28 : f32 to vector<2x1xf32>
    %52 = arith.cmpf ogt, %50, %51 : vector<2x1xf32>
    %53 = arith.extui %52 : vector<2x1xi1> to vector<2x1xi32>
    %54 = arith.sitofp %53 : vector<2x1xi32> to vector<2x1xf32>
    %55 = tpu.iota {dimensions = array<i32: 1>} : vector<2x128xi32>
    %c0_i32_29 = arith.constant 0 : i32
    %56 = vector.broadcast %c0_i32_29 : i32 to vector<2x128xi32>
    %57 = arith.cmpi eq, %55, %56 : vector<2x128xi32>
    %c1_i32 = arith.constant 1 : i32
    %58 = vector.broadcast %c1_i32 : i32 to vector<2x128xi32>
    %59 = arith.cmpi eq, %55, %58 : vector<2x128xi32>
    %cst_30 = arith.constant 0.000000e+00 : f32
    %60 = vector.shape_cast %54 : vector<2x1xf32> to vector<2x1xf32>
    %61 = vector.broadcast %60 : vector<2x1xf32> to vector<2x128xf32>
    %62 = vector.broadcast %cst_30 : f32 to vector<2x128xf32>
    %63 = arith.select %59, %61, %62 : vector<2x128xi1>, vector<2x128xf32>
    %64 = vector.shape_cast %50 : vector<2x1xf32> to vector<2x1xf32>
    %65 = vector.broadcast %64 : vector<2x1xf32> to vector<2x128xf32>
    %66 = arith.select %57, %65, %63 : vector<2x128xi1>, vector<2x128xf32>
    %c0_31 = arith.constant 0 : index
    %c0_32 = arith.constant 0 : index
    %c0_33 = arith.constant 0 : index
    %67 = vector.load %arg6[%c0_31, %c0_32, %c0_33] : memref<1x2x128xf32, #tpu.memory_space<vmem>>, vector<1x2x128xf32>
    %68 = vector.shape_cast %67 : vector<1x2x128xf32> to vector<2x128xf32>
    %69 = vector.shape_cast %66 : vector<2x128xf32> to vector<1x2x128xf32>
    tpu.vector_store %arg6[%c0_31, %c0_32, %c0_33], %69 {strides = array<i32>} : memref<1x2x128xf32, #tpu.memory_space<vmem>>, vector<1x2x128xf32>,
    return
  }
  func.func @transform_0(%arg0: i32) -> (i32, i32, i32) {
    %c0_i32 = arith.constant 0 : i32
    %c0_i32_0 = arith.constant 0 : i32
    %c0_i32_1 = arith.constant 0 : i32
    return %arg0, %c0_i32, %c0_i32_0 : i32, i32, i32
  }
  func.func @transform_1(%arg0: i32) -> (i32, i32, i32) {
    %c0_i32 = arith.constant 0 : i32
    %c0_i32_0 = arith.constant 0 : i32
    %c0_i32_1 = arith.constant 0 : i32
    %c0_i32_2 = arith.constant 0 : i32
    return %c0_i32, %c0_i32_0, %c0_i32_1 : i32, i32, i32
  }
  func.func @transform_2(%arg0: i32) -> (i32, i32) {
    %c0_i32 = arith.constant 0 : i32
    %c0_i32_0 = arith.constant 0 : i32
    %c0_i32_1 = arith.constant 0 : i32
    return %c0_i32, %c0_i32_0 : i32, i32
  }
  func.func @transform_3(%arg0: i32) -> (i32, i32) {
    %c0_i32 = arith.constant 0 : i32
    %c0_i32_0 = arith.constant 0 : i32
    %c0_i32_1 = arith.constant 0 : i32
    return %c0_i32, %c0_i32_0 : i32, i32
  }
  func.func @transform_4(%arg0: i32) -> (i32, i32) {
    %c0_i32 = arith.constant 0 : i32
    %c0_i32_0 = arith.constant 0 : i32
    %c0_i32_1 = arith.constant 0 : i32
    return %c0_i32, %c0_i32_0 : i32, i32
  }
  func.func @transform_5(%arg0: i32) -> (i32, i32, i32) {
    %c0_i32 = arith.constant 0 : i32
    %c0_i32_0 = arith.constant 0 : i32
    %c0_i32_1 = arith.constant 0 : i32
    return %arg0, %c0_i32, %c0_i32_0 : i32, i32, i32
  }
  func.func @transform_6(%arg0: i32) -> (i32, i32, i32) {
    %c0_i32 = arith.constant 0 : i32
    %c0_i32_0 = arith.constant 0 : i32
    %c0_i32_1 = arith.constant 0 : i32
    %c0_i32_2 = arith.constant 0 : i32
    return %c0_i32, %c0_i32_0, %c0_i32_1 : i32, i32, i32
  }
}

</mosaic_0001>

<llo_original>
// kernel: rnn_gate_sequence.1
$region0: #{rnn_gate_sequence.1}
  #allocation0 [shape = 'u32[]', space=smem, size = 0x4, offset = 0x4, fixed_abs, tag = 'smem constant byte address 0x4 - core index']
  #allocation1 [shape = 'u32[144,128]{1,0:T(1,128)}', space=vmem, size = 0x12000, scoped, tag = 'internal scratch']
  #allocation2 [shape = 'f32[2,32]{1,0:T(2,128)}', space=vmem, size = 0x400, scoped, tag = 'scratch operand']
  #allocation3 [shape = 'f32[2,32]{1,0:T(2,128)}', space=vmem, size = 0x400, scoped, tag = 'scratch operand']
  #allocation4 [shape = 'f32[1,1]{1,0:T(1,128)S(6)}', space=smem, size = 0x200, scoped, tag = 'scoped memory for rnn_gate_sequence.1']
  %s0 = inlined_call_operand.hbm [shape: f32[3,2,16], index: 0, kind: input, shape index: {}]
  %s1 = inlined_call_operand.vmem [shape: f32[2,2,32], index: 1, kind: input, shape index: {}]
  %s2 = inlined_call_operand.hbm [shape: f32[49,128], index: 2, kind: input, shape index: {}]
  %s3 = inlined_call_operand.vmem [shape: f32[1,32], index: 3, kind: input, shape index: {}]
  %s4 = inlined_call_operand.<no memory space> [shape: f32[1,1], index: 4, kind: input, shape index: {}]
  %s5 = inlined_call_operand.vmem [shape: f32[3,2,128], index: 5, kind: output, shape index: {0}]
  %s6 = inlined_call_operand.hbm [shape: f32[2,2,32], index: 6, kind: output, shape index: {1}]
  %7 = xla_tuple %s5, %s6
  %s8 = sld [smem:[#allocation0]]
  $region73: #{rnn_gate_sequence.1} parent=0
    _
  %s10 = ssub.s32 1, %s8
  %s11 = scalar_select 0, %s10, %s8
  %12 = sst [smem:[#allocation4]] %s4
  $region1: #{rnn_gate_sequence.1} parent=0
    #allocation5 [shape = 'u8[2048]{0}', space=vmem, size = 0x800, scoped, tag = 'input window, operand 0']
    #allocation6 [shape = 's32[2]{0}', space=sflag, size = 0x8, scoped, tag = 'scoped memory for rnn_gate_sequence.1']
    #allocation7 [shape = 's32[2]{0}', space=sflag, size = 0x8, scoped, tag = 'scoped memory for rnn_gate_sequence.1']
    #allocation8 [shape = 'u8[28672]{0}', space=vmem, size = 0x7000, scoped, tag = 'input window, operand 2, single buffered']
    #allocation9 [shape = 's32[1]{0}', space=sflag, size = 0x4, scoped, tag = 'scoped memory for rnn_gate_sequence.1']
    #allocation10 [shape = 'u8[2048]{0}', space=vmem, size = 0x800, scoped, tag = 'output window, operand 1, single buffered']
    %13 = vsyncpa [#allocation6], 0
    %s14 = scalar_lea.sflag [#allocation6], 1
    %15 = vsyncpa %s14, 0
    %16 = vsyncpa [#allocation9], 0
    %17 = vsyncpa [#allocation7], 0
    loop: start=0, step=1, limit=5
    $region2: #{rnn_gate_sequence.1} parent=1 // loop_pre_header
      _
    $region3: #{rnn_gate_sequence.1} parent=1 // loop_header
      %s19 = sphi 0, %s23
      %p20 = scmp.ge.s32.totalorder %s19, 5
      %s29 = sphi 0, %s31
      %s32 = sphi 0, %s29
      %s33 = sphi 0, %s32
      %s49 = sphi 0, %s33
      %s53 = sphi 0, %s53
      %s55 = sphi 0, %s53
      %s56 = sphi 0, %s55
      %s70 = sphi 0, %s56
      %s74 = sphi 0, %s74
      %s76 = sphi 0, %s74
      %s77 = sphi 0, %s76
      %s91 = sphi 0, %s77
      %s95 = sphi 0, %s95
      %s97 = sphi 0, %s95
      %s98 = sphi 0, %s97
      %s112 = sphi 0, %s98
      %s116 = sphi 0, %s116
      %s118 = sphi 0, %s116
      %s119 = sphi 0, %s118
      %s133 = sphi 0, %s119
      %s139 = sphi 0, %s141
      %s142 = sphi 0, %s139
      %s143 = sphi 0, %s142
      %s159 = sphi 0, %s143
      %s163 = sphi 0, %s163
      %s165 = sphi 0, %s163
      %s166 = sphi 0, %s165
      %s180 = sphi 0, %s166
    $region4: #{rnn_gate_sequence.1} parent=1 // loop_header_branch
      %22 = sbr.rel (%p20) target = $region8
    $region5: #{rnn_gate_sequence.1} parent=1 // loop_body
      %s24 = ssub.s32 %s19, 1
      %s25 = ssub.s32 %s19, 2
      %s26 = sadd.s32 %s19, 1
      %s27 = ssub.s32 %s19, %s26
      %p28 = scmp.eq.s32.totalorder %s27, 0
      %s30 = sadd.s32 %s29, 1
      %s31 = scalar_select %p28, %s29, %s30
      %p34 = pneg %p28
      %p35 = scmp.eq.s32.totalorder %s19, 2
      %p36 = por %p34, %p35
      %p37 = scmp.ne.s32.totalorder %s29, %s32
      %p38 = scmp.eq.s32.totalorder %s19, 0
      %p39 = por %p37, %p38
      %p40 = scmp.ne.s32.totalorder %s29, %s32
      %p41 = scmp.eq.s32.totalorder %s24, 2
      %p42 = por %p40, %p41
      %p43 = scmp.ne.s32.totalorder %s32, %s33
      %p44 = scmp.eq.s32.totalorder %s24, 0
      %p45 = por %p43, %p44
      %p46 = scmp.ne.s32.totalorder %s32, %s33
      %p47 = scmp.eq.s32.totalorder %s25, 2
      %p48 = por %p46, %p47
      %p50 = scmp.ne.s32.totalorder %s33, %s49
      %p51 = scmp.eq.s32.totalorder %s25, 0
      %p52 = por %p50, %p51
      %s54 = sadd.s32 %s53, 1
      %p57 = scmp.eq.s32.totalorder %s19, 2
      %p58 = scmp.ne.s32.totalorder %s53, %s55
      %p59 = scmp.eq.s32.totalorder %s19, 0
      %p60 = por %p58, %p59
      %p61 = scmp.ne.s32.totalorder %s53, %s55
      %p62 = scmp.eq.s32.totalorder %s24, 2
      %p63 = por %p61, %p62
      %p64 = scmp.ne.s32.totalorder %s55, %s56
      %p65 = scmp.eq.s32.totalorder %s24, 0
      %p66 = por %p64, %p65
      %p67 = scmp.ne.s32.totalorder %s55, %s56
      %p68 = scmp.eq.s32.totalorder %s25, 2
      %p69 = por %p67, %p68
      %p71 = scmp.ne.s32.totalorder %s56, %s70
      %p72 = scmp.eq.s32.totalorder %s25, 0
      %p73 = por %p71, %p72
      %s75 = sadd.s32 %s74, 1
      %p78 = scmp.eq.s32.totalorder %s19, 2
      %p79 = scmp.ne.s32.totalorder %s74, %s76
      %p80 = scmp.eq.s32.totalorder %s19, 0
      %p81 = por %p79, %p80
      %p82 = scmp.ne.s32.totalorder %s74, %s76
      %p83 = scmp.eq.s32.totalorder %s24, 2
      %p84 = por %p82, %p83
      %p85 = scmp.ne.s32.totalorder %s76, %s77
      %p86 = scmp.eq.s32.totalorder %s24, 0
      %p87 = por %p85, %p86
      %p88 = scmp.ne.s32.totalorder %s76, %s77
      %p89 = scmp.eq.s32.totalorder %s25, 2
      %p90 = por %p88, %p89
      %p92 = scmp.ne.s32.totalorder %s77, %s91
      %p93 = scmp.eq.s32.totalorder %s25, 0
      %p94 = por %p92, %p93
      %s96 = sadd.s32 %s95, 1
      %p99 = scmp.eq.s32.totalorder %s19, 2
      %p100 = scmp.ne.s32.totalorder %s95, %s97
      %p101 = scmp.eq.s32.totalorder %s19, 0
      %p102 = por %p100, %p101
      %p103 = scmp.ne.s32.totalorder %s95, %s97
      %p104 = scmp.eq.s32.totalorder %s24, 2
      %p105 = por %p103, %p104
      %p106 = scmp.ne.s32.totalorder %s97, %s98
      %p107 = scmp.eq.s32.totalorder %s24, 0
      %p108 = por %p106, %p107
      %p109 = scmp.ne.s32.totalorder %s97, %s98
      %p110 = scmp.eq.s32.totalorder %s25, 2
      %p111 = por %p109, %p110
      %p113 = scmp.ne.s32.totalorder %s98, %s112
      %p114 = scmp.eq.s32.totalorder %s25, 0
      %p115 = por %p113, %p114
      %s117 = sadd.s32 %s116, 1
      %p120 = scmp.eq.s32.totalorder %s19, 2
      %p121 = scmp.ne.s32.totalorder %s116, %s118
      %p122 = scmp.eq.s32.totalorder %s19, 0
      %p123 = por %p121, %p122
      %p124 = scmp.ne.s32.totalorder %s116, %s118
      %p125 = scmp.eq.s32.totalorder %s24, 2
      %p126 = por %p124, %p125
      %p127 = scmp.ne.s32.totalorder %s118, %s119
      %p128 = scmp.eq.s32.totalorder %s24, 0
      %p129 = por %p127, %p128
      %p130 = scmp.ne.s32.totalorder %s118, %s119
      %p131 = scmp.eq.s32.totalorder %s25, 2
      %p132 = por %p130, %p131
      %p134 = scmp.ne.s32.totalorder %s119, %s133
      %p135 = scmp.eq.s32.totalorder %s25, 0
      %p136 = por %p134, %p135
      %s137 = ssub.s32 %s19, %s26
      %p138 = scmp.eq.s32.totalorder %s137, 0
      %s140 = sadd.s32 %s139, 1
      %s141 = scalar_select %p138, %s139, %s140
      %p144 = pneg %p138
      %p145 = scmp.eq.s32.totalorder %s19, 2
      %p146 = por %p144, %p145
      %p147 = scmp.ne.s32.totalorder %s139, %s142
      %p148 = scmp.eq.s32.totalorder %s19, 0
      %p149 = por %p147, %p148
      %p150 = scmp.ne.s32.totalorder %s139, %s142
      %p151 = scmp.eq.s32.totalorder %s24, 2
      %p152 = por %p150, %p151
      %p153 = scmp.ne.s32.totalorder %s142, %s143
      %p154 = scmp.eq.s32.totalorder %s24, 0
      %p155 = por %p153, %p154
      %p156 = scmp.ne.s32.totalorder %s142, %s143
      %p157 = scmp.eq.s32.totalorder %s25, 2
      %p158 = por %p156, %p157
      %p160 = scmp.ne.s32.totalorder %s143, %s159
      %p161 = scmp.eq.s32.totalorder %s25, 0
      %p162 = por %p160, %p161
      %s164 = sadd.s32 %s163, 1
      %p167 = scmp.eq.s32.totalorder %s19, 2
      %p168 = scmp.ne.s32.totalorder %s163, %s165
      %p169 = scmp.eq.s32.totalorder %s19, 0
      %p170 = por %p168, %p169
      %p171 = scmp.ne.s32.totalorder %s163, %s165
      %p172 = scmp.eq.s32.totalorder %s24, 2
      %p173 = por %p171, %p172
      %p174 = scmp.ne.s32.totalorder %s165, %s166
      %p175 = scmp.eq.s32.totalorder %s24, 0
      %p176 = por %p174, %p175
      %p177 = scmp.ne.s32.totalorder %s165, %s166
      %p178 = scmp.eq.s32.totalorder %s25, 2
      %p179 = por %p177, %p178
      %p181 = scmp.ne.s32.totalorder %s166, %s180
      %p182 = scmp.eq.s32.totalorder %s25, 0
      %p183 = por %p181, %p182
      %p184 = scmp.le.s32.totalorder 1, %s19
      %p185 = scmp.lt.s32.totalorder %s19, 4
      %p186 = pnand %p184, %p185
      %p187 = pneg %p186
      // Predicated region
      $region9: #{rnn_gate_sequence.1} parent=5 // pred_check
        _
      $region10: #{rnn_gate_sequence.1} parent=5 // pred_check_branch
        %189 = sbr.rel (%p186) target = $region12
      $region11: #{rnn_gate_sequence.1} parent=5 // pred_region
        %s190 = ssub.s32 %s19, 1
        // Predicated region
        $region13: #{rnn_gate_sequence.1} parent=11 // pred_check
          %p191 = pneg %p66
        $region14: #{rnn_gate_sequence.1} parent=11 // pred_check_branch
          %193 = sbr.rel (%p191) target = $region16
        $region15: #{rnn_gate_sequence.1} parent=11 // pred_region
          _
        $region16: #{rnn_gate_sequence.1} parent=11 // pred_fallthru
          _
        // Predicated region
        $region17: #{rnn_gate_sequence.1} parent=11 // pred_check
          %p194 = pneg %p87
        $region18: #{rnn_gate_sequence.1} parent=11 // pred_check_branch
          %196 = sbr.rel (%p194) target = $region20
        $region19: #{rnn_gate_sequence.1} parent=11 // pred_region
          %s198 = ssub.s32 896, 896
          %199 = vsyncadd [#allocation9], %s198
          %s200 = sshll.u32 [#allocation8], 4
          %s201 = int_to_ptr.vmem [resolvable:$true] %s200
          %206 = dma.hbm_to_vmem [thread:$0]  %s2, 896, %s201, [#allocation9], 128, 128, 8
        $region20: #{rnn_gate_sequence.1} parent=11 // pred_fallthru
          _
        // Predicated region
        $region21: #{rnn_gate_sequence.1} parent=11 // pred_check
          %p207 = pneg %p108
        $region22: #{rnn_gate_sequence.1} parent=11 // pred_check_branch
          %209 = sbr.rel (%p207) target = $region24
        $region23: #{rnn_gate_sequence.1} parent=11 // pred_region
          _
        $region24: #{rnn_gate_sequence.1} parent=11 // pred_fallthru
          _
        // Predicated region
        $region25: #{rnn_gate_sequence.1} parent=11 // pred_check
          %p210 = pneg %p129
        $region26: #{rnn_gate_sequence.1} parent=11 // pred_check_branch
          %212 = sbr.rel (%p210) target = $region28
        $region27: #{rnn_gate_sequence.1} parent=11 // pred_region
          _
        $region28: #{rnn_gate_sequence.1} parent=11 // pred_fallthru
          _
      $region12: #{rnn_gate_sequence.1} parent=5 // pred_fallthru
        _
      %p213 = scmp.lt.s32.totalorder %s19, 3
      // Predicated region
      $region29: #{rnn_gate_sequence.1} parent=5 // pred_check
        %p214 = pneg %p213
      $region30: #{rnn_gate_sequence.1} parent=5 // pred_check_branch
        %216 = sbr.rel (%p214) target = $region32
      $region31: #{rnn_gate_sequence.1} parent=5 // pred_region
        // Predicated region
        $region33: #{rnn_gate_sequence.1} parent=31 // pred_check
          %p217 = pneg %p39
        $region34: #{rnn_gate_sequence.1} parent=31 // pred_check_branch
          %219 = sbr.rel (%p217) target = $region36
        $region35: #{rnn_gate_sequence.1} parent=31 // pred_region
          %s220 = sand.u32 %s29, 1
          %s221 = scalar_lea.sflag [#allocation6], %s220
          %s222 = sand.u32 %s29, 1
          %s223 = smul.addr %s222, 2
          %s224 = scalar_lea.vmem [#allocation5], %s223
          %s226 = ssub.s32 32, 32
          %227 = vsyncadd %s221, %s226
          %s228 = smul.addr %s19, 32
          %s229 = scalar_lea.hbm %s0, %s228
          %s231 = sshll.u32 %s224, 4
          %s232 = int_to_ptr.vmem [resolvable:$true] %s231
          %234 = dma.hbm_to_vmem [thread:$0]  %s229, 32, %s232, %s221
        $region36: #{rnn_gate_sequence.1} parent=31 // pred_fallthru
          _
      $region32: #{rnn_gate_sequence.1} parent=5 // pred_fallthru
        _
      %p235 = scmp.le.s32.totalorder 1, %s19
      %p236 = scmp.lt.s32.totalorder %s19, 4
      %p237 = pnand %p235, %p236
      %p238 = pneg %p237
      // Predicated region
      $region37: #{rnn_gate_sequence.1} parent=5 // pred_check
        _
      $region38: #{rnn_gate_sequence.1} parent=5 // pred_check_branch
        %240 = sbr.rel (%p237) target = $region40
      $region39: #{rnn_gate_sequence.1} parent=5 // pred_region
        %s241 = ssub.s32 %s19, 1
        %s242 = sand.u32 %s32, 1
        %s243 = scalar_lea.sflag [#allocation6], %s242
        %s244 = sand.u32 %s32, 1
        %s245 = smul.addr %s244, 2
        %s246 = scalar_lea.vmem [#allocation5], %s245
        // Predicated region
        $region41: #{rnn_gate_sequence.1} parent=39 // pred_check
          %p247 = pneg %p45
        $region42: #{rnn_gate_sequence.1} parent=39 // pred_check_branch
          %249 = sbr.rel (%p247) target = $region44
        $region43: #{rnn_gate_sequence.1} parent=39 // pred_region
          %250 = dma.done %s243, 32
        $region44: #{rnn_gate_sequence.1} parent=39 // pred_fallthru
          _
        // Predicated region
        $region45: #{rnn_gate_sequence.1} parent=39 // pred_check
          %p251 = pneg %p87
        $region46: #{rnn_gate_sequence.1} parent=39 // pred_check_branch
          %253 = sbr.rel (%p251) target = $region48
        $region47: #{rnn_gate_sequence.1} parent=39 // pred_region
          %254 = dma.done [#allocation9], 896
        $region48: #{rnn_gate_sequence.1} parent=39 // pred_fallthru
          _
        %s255 = sand.u32 %s32, 1
        %s256 = scalar_lea.sflag [#allocation6], %s255
        %s257 = sand.u32 %s32, 1
        %s258 = smul.addr %s257, 2
        %s259 = scalar_lea.vmem [#allocation5], %s258
        %p260 = pneg %p45
        %p261 = pneg %p42
        %p262 = pneg %p66
        %p263 = pneg %p63
        %p264 = pneg %p87
        %p265 = pneg %p84
        %p266 = pneg %p108
        %p267 = pneg %p105
        %p268 = pneg %p129
        %p269 = pneg %p126
        %p270 = pneg %p155
        %p271 = pneg %p152
        %p272 = scmp.lt.s32.totalorder %s24, 2
        %s273 = scalar_select %p272, %s24, 2
        %s274 = smul.addr %s273, 2
        %s275 = scalar_lea.vmem %s5, %s274
        %p276 = pneg %p176
        %p277 = pneg %p173
        %p278 = scmp.lt.s32.totalorder %s24, 2
        %s279 = scalar_select %p278, %s24, 2
        %s280 = smul.addr %s279, 2
        %s281 = scalar_lea.vmem %s5, %s280
        %p282 = scmp.eq.s32.totalorder %s24, 0
        // Predicated region
        $region49: #{rnn_gate_sequence.1} parent=39 // pred_check
          %p283 = pneg %p282
        $region50: #{rnn_gate_sequence.1} parent=39 // pred_check_branch
          %285 = sbr.rel (%p283) target = $region52
        $region51: #{rnn_gate_sequence.1} parent=39 // pred_region
          %v286 = vld [vmem:[%s1] sm:$0x3]
          %vm287 = vcmask 254976
          %288 = vst.msk [vmem:[#allocation2] sm:$0x3] %vm287, %v286
          %s289 = scalar_lea.vmem %s1, 2
          %v290 = vld [vmem:[%s289] sm:$0x3]
          %291 = vst.msk [vmem:[#allocation3] sm:$0x3] %vm287, %v290
        $region52: #{rnn_gate_sequence.1} parent=39 // pred_fallthru
          _
        %v292 = vld [vmem:[%s246] sm:$0x3]
        %v293 = vld [vmem:[#allocation2] sm:$0x3]
        %v294 = vld [vmem:[#allocation3] sm:$0x3]
        %v295 = vld [vmem:[#allocation8] sm:$0xff]
        %v296 = vld [vmem:[#allocation8 + $0x8] sm:$0xff]
        %v297 = vld [vmem:[#allocation8 + $0x10] sm:$0xff]
        %v298 = vld [vmem:[#allocation8 + $0x18] sm:$0xff]
        %v299 = vld [vmem:[#allocation8 + $0x20] sm:$0xff]
        %v300 = vld [vmem:[#allocation8 + $0x28] sm:$0xff]
        %vm301 = vcmask 261120
        %v303 = vsel %vm301, %v293, 0
        %305 = vmatprep.subr.mxu0 0.0
        %v306 = vand.u32 %v297, 4294901760
        %307 = vmatpush1.msra.mxu0 %v306
        %308 = vmatprep.subr.mxu0 0.0
        %v309 = vand.u32 %v298, 4294901760
        %310 = vmatpush1.msra.mxu0 %v309
        %311 = vmatprep.subr.mxu0 0.0
        %v312 = vand.u32 %v299, 4294901760
        %313 = vmatpush1.msra.mxu0 %v312
        %314 = vmatprep.subr.mxu0 0.0
        %v315 = vand.u32 %v300, 4294901760
        %316 = vmatpush1.msra.mxu0 %v315
        %317 = vmatprep.subr.mxu0 0.0
        %318 = vmatpush1.msra.mxu0 0.0
        %319 = vmatprep.subr.mxu0 0.0
        %320 = vmatpush1.msra.mxu0 0.0
        %321 = vmatprep.subr.mxu0 0.0
        %322 = vmatpush1.msra.mxu0 0.0
        %323 = vmatprep.subr.mxu0 0.0
        %324 = vmatpush1.msra.mxu0 0.0
        %325 = vmatprep.subr.mxu0 0.0
        %326 = vmatpush1.msra.mxu0 0.0
        %327 = vmatprep.subr.mxu0 0.0
        %328 = vmatpush1.msra.mxu0 0.0
        %329 = vmatprep.subr.mxu0 0.0
        %330 = vmatpush1.msra.mxu0 0.0
        %331 = vmatprep.subr.mxu0 0.0
        %332 = vmatpush1.msra.mxu0 0.0
        %333 = vmatprep.subr.mxu0 0.0
        %334 = vmatpush1.msra.mxu0 0.0
        %335 = vmatprep.subr.mxu0 0.0
        %336 = vmatpush1.msra.mxu0 0.0
        %337 = vmatprep.subr.mxu0 0.0
        %338 = vmatpush1.msra.mxu0 0.0
        %339 = vmatprep.subr.mxu0 0.0
        %340 = vmatpush1.msra.mxu0 0.0
        %341 = vmatprep.subr.mxu0 0.0
        %342 = vmatpush1.msra.mxu0 0.0
        %343 = vmatprep.subr.mxu0 0.0
        %344 = vmatpush1.msra.mxu0 0.0
        %345 = vmatprep.subr.mxu0 0.0
        %346 = vmatpush1.msra.mxu0 0.0
        %347 = vmatprep.subr.mxu0 0.0
        %348 = vmatpush1.msra.mxu0 0.0
        %349 = vmatprep.subr.mxu0 0.0
        %350 = vmatpush1.msra.mxu0 0.0
        %351 = vmatprep.subr.mxu0 0.0
        %352 = vmatpush1.msra.mxu0 0.0
        %353 = vmatprep.subr.mxu0 0.0
        %354 = vmatpush1.msra.mxu0 0.0
        %355 = vmatprep.subr.mxu0 0.0
        %356 = vmatpush1.msra.mxu0 0.0
        %357 = vmatprep.subr.mxu0 0.0
        %358 = vmatpush1.msra.mxu0 0.0
        %359 = vmatprep.subr.mxu0 0.0
        %360 = vmatpush1.msra.mxu0 0.0
        %361 = vmatprep.subr.mxu0 0.0
        %362 = vmatpush1.msra.mxu0 0.0
        %363 = vmatprep.subr.mxu0 0.0
        %364 = vmatpush1.msra.mxu0 0.0
        %365 = vmatprep.subr.mxu0 0.0
        %366 = vmatpush1.msra.mxu0 0.0
        %367 = vmatprep.subr.mxu0 0.0
        %368 = vmatpush1.msra.mxu0 0.0
        %369 = vmatprep.subr.mxu0 0.0
        %370 = vmatpush1.msra.mxu0 0.0
        %371 = vmatprep.subr.mxu0 0.0
        %372 = vmatpush1.msra.mxu0 0.0
        %373 = vmatprep.mubr.f32.mxu0 0.0
        %v374 = vand.u32 %v303, 4294901760
        %v375 = vsub.f32 %v303, %v374
        %v376 = vand.u32 %v375, 4294901760
        %v377 = vsub.f32 %v375, %v376
        %v378 = vand.u32 %v377, 4294901760
        %379 = vmatmul.mubr.f32.gmra.mrb[0].mxu0 %v378
        %v380 = vpop.f32.mrb[0].mxu0
        %v381 = vadd.f32 0.0, %v380
        %v382 = vpop.f32.mrb[0].mxu0
        %383 = vdwg.mxu0
        %384 = vmatprep.subr.mxu0 0.0
        %v385 = vand.u32 %v297, 4294901760
        %v386 = vsub.f32 %v297, %v385
        %v387 = vand.u32 %v386, 4294901760
        %v388 = vsub.f32 %v386, %v387
        %v389 = vand.u32 %v388, 4294901760
        %390 = vmatpush1.msra.mxu0 %v389
        %391 = vmatprep.subr.mxu0 0.0
        %v392 = vand.u32 %v298, 4294901760
        %v393 = vsub.f32 %v298, %v392
        %v394 = vand.u32 %v393, 4294901760
        %v395 = vsub.f32 %v393, %v394
        %v396 = vand.u32 %v395, 4294901760
        %397 = vmatpush1.msra.mxu0 %v396
        %398 = vmatprep.subr.mxu0 0.0
        %v399 = vand.u32 %v299, 4294901760
        %v400 = vsub.f32 %v299, %v399
        %v401 = vand.u32 %v400, 4294901760
        %v402 = vsub.f32 %v400, %v401
        %v403 = vand.u32 %v402, 4294901760
        %404 = vmatpush1.msra.mxu0 %v403
        %405 = vmatprep.subr.mxu0 0.0
        %v406 = vand.u32 %v300, 4294901760
        %v407 = vsub.f32 %v300, %v406
        %v408 = vand.u32 %v407, 4294901760
        %v409 = vsub.f32 %v407, %v408
        %v410 = vand.u32 %v409, 4294901760
        %411 = vmatpush1.msra.mxu0 %v410
        %412 = vmatprep.subr.mxu0 0.0
        %413 = vmatpush1.msra.mxu0 0.0
        %414 = vmatprep.subr.mxu0 0.0
        %415 = vmatpush1.msra.mxu0 0.0
        %416 = vmatprep.subr.mxu0 0.0
        %417 = vmatpush1.msra.mxu0 0.0
        %418 = vmatprep.subr.mxu0 0.0
        %419 = vmatpush1.msra.mxu0 0.0
        %420 = vmatprep.subr.mxu0 0.0
        %421 = vmatpush1.msra.mxu0 0.0
        %422 = vmatprep.subr.mxu0 0.0
        %423 = vmatpush1.msra.mxu0 0.0
        %424 = vmatprep.subr.mxu0 0.0
        %425 = vmatpush1.msra.mxu0 0.0
        %426 = vmatprep.subr.mxu0 0.0
        %427 = vmatpush1.msra.mxu0 0.0
        %428 = vmatprep.subr.mxu0 0.0
        %429 = vmatpush1.msra.mxu0 0.0
        %430 = vmatprep.subr.mxu0 0.0
        %431 = vmatpush1.msra.mxu0 0.0
        %432 = vmatprep.subr.mxu0 0.0
        %433 = vmatpush1.msra.mxu0 0.0
        %434 = vmatprep.subr.mxu0 0.0
        %435 = vmatpush1.msra.mxu0 0.0
        %436 = vmatprep.subr.mxu0 0.0
        %437 = vmatpush1.msra.mxu0 0.0
        %438 = vmatprep.subr.mxu0 0.0
        %439 = vmatpush1.msra.mxu0 0.0
        %440 = vmatprep.subr.mxu0 0.0
        %441 = vmatpush1.msra.mxu0 0.0
        %442 = vmatprep.subr.mxu0 0.0
        %443 = vmatpush1.msra.mxu0 0.0
        %444 = vmatprep.subr.mxu0 0.0
        %445 = vmatpush1.msra.mxu0 0.0
        %446 = vmatprep.subr.mxu0 0.0
        %447 = vmatpush1.msra.mxu0 0.0
        %448 = vmatprep.subr.mxu0 0.0
        %449 = vmatpush1.msra.mxu0 0.0
        %450 = vmatprep.subr.mxu0 0.0
        %451 = vmatpush1.msra.mxu0 0.0
        %452 = vmatprep.subr.mxu0 0.0
        %453 = vmatpush1.msra.mxu0 0.0
        %454 = vmatprep.subr.mxu0 0.0
        %455 = vmatpush1.msra.mxu0 0.0
        %456 = vmatprep.subr.mxu0 0.0
        %457 = vmatpush1.msra.mxu0 0.0
        %458 = vmatprep.subr.mxu0 0.0
        %459 = vmatpush1.msra.mxu0 0.0
        %460 = vmatprep.subr.mxu0 0.0
        %461 = vmatpush1.msra.mxu0 0.0
        %462 = vmatprep.subr.mxu0 0.0
        %463 = vmatpush1.msra.mxu0 0.0
        %464 = vmatprep.subr.mxu0 0.0
        %465 = vmatpush1.msra.mxu0 0.0
        %466 = vmatprep.subr.mxu0 0.0
        %467 = vmatpush1.msra.mxu0 0.0
        %468 = vmatprep.mubr.f32.mxu0 0.0
        %v469 = vand.u32 %v303, 4294901760
        %470 = vmatmul.mubr.f32.gmra.mrb[0].mxu0 %v469
        %v471 = vpop.f32.mrb[0].mxu0
        %v472 = vadd.f32 %v381, %v471
        %v473 = vpop.f32.mrb[0].mxu0
        %474 = vdwg.mxu0
        %475 = vmatprep.subr.mxu0 0.0
        %v476 = vand.u32 %v297, 4294901760
        %v477 = vsub.f32 %v297, %v476
        %478 = vmatpush1.msra.mxu0 %v477
        %479 = vmatprep.subr.mxu0 0.0
        %v480 = vand.u32 %v298, 4294901760
        %v481 = vsub.f32 %v298, %v480
        %482 = vmatpush1.msra.mxu0 %v481
        %483 = vmatprep.subr.mxu0 0.0
        %v484 = vand.u32 %v299, 4294901760
        %v485 = vsub.f32 %v299, %v484
        %486 = vmatpush1.msra.mxu0 %v485
        %487 = vmatprep.subr.mxu0 0.0
        %v488 = vand.u32 %v300, 4294901760
        %v489 = vsub.f32 %v300, %v488
        %490 = vmatpush1.msra.mxu0 %v489
        %491 = vmatprep.subr.mxu0 0.0
        %492 = vmatpush1.msra.mxu0 0.0
        %493 = vmatprep.subr.mxu0 0.0
        %494 = vmatpush1.msra.mxu0 0.0
        %495 = vmatprep.subr.mxu0 0.0
        %496 = vmatpush1.msra.mxu0 0.0
        %497 = vmatprep.subr.mxu0 0.0
        %498 = vmatpush1.msra.mxu0 0.0
        %499 = vmatprep.subr.mxu0 0.0
        %500 = vmatpush1.msra.mxu0 0.0
        %501 = vmatprep.subr.mxu0 0.0
        %502 = vmatpush1.msra.mxu0 0.0
        %503 = vmatprep.subr.mxu0 0.0
        %504 = vmatpush1.msra.mxu0 0.0
        %505 = vmatprep.subr.mxu0 0.0
        %506 = vmatpush1.msra.mxu0 0.0
        %507 = vmatprep.subr.mxu0 0.0
        %508 = vmatpush1.msra.mxu0 0.0
        %509 = vmatprep.subr.mxu0 0.0
        %510 = vmatpush1.msra.mxu0 0.0
        %511 = vmatprep.subr.mxu0 0.0
        %512 = vmatpush1.msra.mxu0 0.0
        %513 = vmatprep.subr.mxu0 0.0
        %514 = vmatpush1.msra.mxu0 0.0
        %515 = vmatprep.subr.mxu0 0.0
        %516 = vmatpush1.msra.mxu0 0.0
        %517 = vmatprep.subr.mxu0 0.0
        %518 = vmatpush1.msra.mxu0 0.0
        %519 = vmatprep.subr.mxu0 0.0
        %520 = vmatpush1.msra.mxu0 0.0
        %521 = vmatprep.subr.mxu0 0.0
        %522 = vmatpush1.msra.mxu0 0.0
        %523 = vmatprep.subr.mxu0 0.0
        %524 = vmatpush1.msra.mxu0 0.0
        %525 = vmatprep.subr.mxu0 0.0
        %526 = vmatpush1.msra.mxu0 0.0
        %527 = vmatprep.subr.mxu0 0.0
        %528 = vmatpush1.msra.mxu0 0.0
        %529 = vmatprep.subr.mxu0 0.0
        %530 = vmatpush1.msra.mxu0 0.0
        %531 = vmatprep.subr.mxu0 0.0
        %532 = vmatpush1.msra.mxu0 0.0
        %533 = vmatprep.subr.mxu0 0.0
        %534 = vmatpush1.msra.mxu0 0.0
        %535 = vmatprep.subr.mxu0 0.0
        %536 = vmatpush1.msra.mxu0 0.0
        %537 = vmatprep.subr.mxu0 0.0
        %538 = vmatpush1.msra.mxu0 0.0
        %539 = vmatprep.subr.mxu0 0.0
        %540 = vmatpush1.msra.mxu0 0.0
        %541 = vmatprep.subr.mxu0 0.0
        %542 = vmatpush1.msra.mxu0 0.0
        %543 = vmatprep.subr.mxu0 0.0
        %544 = vmatpush1.msra.mxu0 0.0
        %545 = vmatprep.subr.mxu0 0.0
        %546 = vmatpush1.msra.mxu0 0.0
        %547 = vmatprep.mubr.f32.mxu0 0.0
        %v548 = vand.u32 %v303, 4294901760
        %v549 = vsub.f32 %v303, %v548
        %550 = vmatmul.mubr.f32.gmra.mrb[0].mxu0 %v549
        %v551 = vpop.f32.mrb[0].mxu0
        %v552 = vadd.f32 %v472, %v551
        %v553 = vpop.f32.mrb[0].mxu0
        %554 = vdwg.mxu0
        %555 = vmatprep.subr.mxu0 0.0
        %v556 = vand.u32 %v297, 4294901760
        %557 = vmatpush1.msra.mxu0 %v556
        %558 = vmatprep.subr.mxu0 0.0
        %v559 = vand.u32 %v298, 4294901760
        %560 = vmatpush1.msra.mxu0 %v559
        %561 = vmatprep.subr.mxu0 0.0
        %v562 = vand.u32 %v299, 4294901760
        %563 = vmatpush1.msra.mxu0 %v562
        %564 = vmatprep.subr.mxu0 0.0
        %v565 = vand.u32 %v300, 4294901760
        %566 = vmatpush1.msra.mxu0 %v565
        %567 = vmatprep.subr.mxu0 0.0
        %568 = vmatpush1.msra.mxu0 0.0
        %569 = vmatprep.subr.mxu0 0.0
        %570 = vmatpush1.msra.mxu0 0.0
        %571 = vmatprep.subr.mxu0 0.0
        %572 = vmatpush1.msra.mxu0 0.0
        %573 = vmatprep.subr.mxu0 0.0
        %574 = vmatpush1.msra.mxu0 0.0
        %575 = vmatprep.subr.mxu0 0.0
        %576 = vmatpush1.msra.mxu0 0.0
        %577 = vmatprep.subr.mxu0 0.0
        %578 = vmatpush1.msra.mxu0 0.0
        %579 = vmatprep.subr.mxu0 0.0
        %580 = vmatpush1.msra.mxu0 0.0
        %581 = vmatprep.subr.mxu0 0.0
        %582 = vmatpush1.msra.mxu0 0.0
        %583 = vmatprep.subr.mxu0 0.0
        %584 = vmatpush1.msra.mxu0 0.0
        %585 = vmatprep.subr.mxu0 0.0
        %586 = vmatpush1.msra.mxu0 0.0
        %587 = vmatprep.subr.mxu0 0.0
        %588 = vmatpush1.msra.mxu0 0.0
        %589 = vmatprep.subr.mxu0 0.0
        %590 = vmatpush1.msra.mxu0 0.0
        %591 = vmatprep.subr.mxu0 0.0
        %592 = vmatpush1.msra.mxu0 0.0
        %593 = vmatprep.subr.mxu0 0.0
        %594 = vmatpush1.msra.mxu0 0.0
        %595 = vmatprep.subr.mxu0 0.0
        %596 = vmatpush1.msra.mxu0 0.0
        %597 = vmatprep.subr.mxu0 0.0
        %598 = vmatpush1.msra.mxu0 0.0
        %599 = vmatprep.subr.mxu0 0.0
        %600 = vmatpush1.msra.mxu0 0.0
        %601 = vmatprep.subr.mxu0 0.0
        %602 = vmatpush1.msra.mxu0 0.0
        %603 = vmatprep.subr.mxu0 0.0
        %604 = vmatpush1.msra.mxu0 0.0
        %605 = vmatprep.subr.mxu0 0.0
        %606 = vmatpush1.msra.mxu0 0.0
        %607 = vmatprep.subr.mxu0 0.0
        %608 = vmatpush1.msra.mxu0 0.0
        %609 = vmatprep.subr.mxu0 0.0
        %610 = vmatpush1.msra.mxu0 0.0
        %611 = vmatprep.subr.mxu0 0.0
        %612 = vmatpush1.msra.mxu0 0.0
        %613 = vmatprep.subr.mxu0 0.0
        %614 = vmatpush1.msra.mxu0 0.0
        %615 = vmatprep.subr.mxu0 0.0
        %616 = vmatpush1.msra.mxu0 0.0
        %617 = vmatprep.subr.mxu0 0.0
        %618 = vmatpush1.msra.mxu0 0.0
        %619 = vmatprep.subr.mxu0 0.0
        %620 = vmatpush1.msra.mxu0 0.0
        %621 = vmatprep.subr.mxu0 0.0
        %622 = vmatpush1.msra.mxu0 0.0
        %623 = vmatprep.mubr.f32.mxu0 0.0
        %v624 = vand.u32 %v303, 4294901760
        %v625 = vsub.f32 %v303, %v624
        %v626 = vand.u32 %v625, 4294901760
        %627 = vmatmul.mubr.f32.gmra.mrb[0].mxu0 %v626
        %v628 = vpop.f32.mrb[0].mxu0
        %v629 = vadd.f32 %v552, %v628
        %v630 = vpop.f32.mrb[0].mxu0
        %631 = vdwg.mxu0
        %632 = vmatprep.subr.mxu0 0.0
        %v633 = vand.u32 %v297, 4294901760
        %v634 = vsub.f32 %v297, %v633
        %v635 = vand.u32 %v634, 4294901760
        %636 = vmatpush1.msra.mxu0 %v635
        %637 = vmatprep.subr.mxu0 0.0
        %v638 = vand.u32 %v298, 4294901760
        %v639 = vsub.f32 %v298, %v638
        %v640 = vand.u32 %v639, 4294901760
        %641 = vmatpush1.msra.mxu0 %v640
        %642 = vmatprep.subr.mxu0 0.0
        %v643 = vand.u32 %v299, 4294901760
        %v644 = vsub.f32 %v299, %v643
        %v645 = vand.u32 %v644, 4294901760
        %646 = vmatpush1.msra.mxu0 %v645
        %647 = vmatprep.subr.mxu0 0.0
        %v648 = vand.u32 %v300, 4294901760
        %v649 = vsub.f32 %v300, %v648
        %v650 = vand.u32 %v649, 4294901760
        %651 = vmatpush1.msra.mxu0 %v650
        %652 = vmatprep.subr.mxu0 0.0
        %653 = vmatpush1.msra.mxu0 0.0
        %654 = vmatprep.subr.mxu0 0.0
        %655 = vmatpush1.msra.mxu0 0.0
        %656 = vmatprep.subr.mxu0 0.0
        %657 = vmatpush1.msra.mxu0 0.0
        %658 = vmatprep.subr.mxu0 0.0
        %659 = vmatpush1.msra.mxu0 0.0
        %660 = vmatprep.subr.mxu0 0.0
        %661 = vmatpush1.msra.mxu0 0.0
        %662 = vmatprep.subr.mxu0 0.0
        %663 = vmatpush1.msra.mxu0 0.0
        %664 = vmatprep.subr.mxu0 0.0
        %665 = vmatpush1.msra.mxu0 0.0
        %666 = vmatprep.subr.mxu0 0.0
        %667 = vmatpush1.msra.mxu0 0.0
        %668 = vmatprep.subr.mxu0 0.0
        %669 = vmatpush1.msra.mxu0 0.0
        %670 = vmatprep.subr.mxu0 0.0
        %671 = vmatpush1.msra.mxu0 0.0
        %672 = vmatprep.subr.mxu0 0.0
        %673 = vmatpush1.msra.mxu0 0.0
        %674 = vmatprep.subr.mxu0 0.0
        %675 = vmatpush1.msra.mxu0 0.0
        %676 = vmatprep.subr.mxu0 0.0
        %677 = vmatpush1.msra.mxu0 0.0
        %678 = vmatprep.subr.mxu0 0.0
        %679 = vmatpush1.msra.mxu0 0.0
        %680 = vmatprep.subr.mxu0 0.0
        %681 = vmatpush1.msra.mxu0 0.0
        %682 = vmatprep.subr.mxu0 0.0
        %683 = vmatpush1.msra.mxu0 0.0
        %684 = vmatprep.subr.mxu0 0.0
        %685 = vmatpush1.msra.mxu0 0.0
        %686 = vmatprep.subr.mxu0 0.0
        %687 = vmatpush1.msra.mxu0 0.0
        %688 = vmatprep.subr.mxu0 0.0
        %689 = vmatpush1.msra.mxu0 0.0
        %690 = vmatprep.subr.mxu0 0.0
        %691 = vmatpush1.msra.mxu0 0.0
        %692 = vmatprep.subr.mxu0 0.0
        %693 = vmatpush1.msra.mxu0 0.0
        %694 = vmatprep.subr.mxu0 0.0
        %695 = vmatpush1.msra.mxu0 0.0
        %696 = vmatprep.subr.mxu0 0.0
        %697 = vmatpush1.msra.mxu0 0.0
        %698 = vmatprep.subr.mxu0 0.0
        %699 = vmatpush1.msra.mxu0 0.0
        %700 = vmatprep.subr.mxu0 0.0
        %701 = vmatpush1.msra.mxu0 0.0
        %702 = vmatprep.subr.mxu0 0.0
        %703 = vmatpush1.msra.mxu0 0.0
        %704 = vmatprep.subr.mxu0 0.0
        %705 = vmatpush1.msra.mxu0 0.0
        %706 = vmatprep.subr.mxu0 0.0
        %707 = vmatpush1.msra.mxu0 0.0
        %708 = vmatprep.mubr.f32.mxu0 0.0
        %v709 = vand.u32 %v303, 4294901760
        %710 = vmatmul.mubr.f32.gmra.mrb[0].mxu0 %v709
        %v711 = vpop.f32.mrb[0].mxu0
        %v712 = vadd.f32 %v629, %v711
        %v713 = vpop.f32.mrb[0].mxu0
        %714 = vdwg.mxu0
        %715 = vmatprep.subr.mxu0 0.0
        %v716 = vand.u32 %v297, 4294901760
        %717 = vmatpush1.msra.mxu0 %v716
        %718 = vmatprep.subr.mxu0 0.0
        %v719 = vand.u32 %v298, 4294901760
        %720 = vmatpush1.msra.mxu0 %v719
        %721 = vmatprep.subr.mxu0 0.0
        %v722 = vand.u32 %v299, 4294901760
        %723 = vmatpush1.msra.mxu0 %v722
        %724 = vmatprep.subr.mxu0 0.0
        %v725 = vand.u32 %v300, 4294901760
        %726 = vmatpush1.msra.mxu0 %v725
        %727 = vmatprep.subr.mxu0 0.0
        %728 = vmatpush1.msra.mxu0 0.0
        %729 = vmatprep.subr.mxu0 0.0
        %730 = vmatpush1.msra.mxu0 0.0
        %731 = vmatprep.subr.mxu0 0.0
        %732 = vmatpush1.msra.mxu0 0.0
        %733 = vmatprep.subr.mxu0 0.0
        %734 = vmatpush1.msra.mxu0 0.0
        %735 = vmatprep.subr.mxu0 0.0
        %736 = vmatpush1.msra.mxu0 0.0
        %737 = vmatprep.subr.mxu0 0.0
        %738 = vmatpush1.msra.mxu0 0.0
        %739 = vmatprep.subr.mxu0 0.0
        %740 = vmatpush1.msra.mxu0 0.0
        %741 = vmatprep.subr.mxu0 0.0
        %742 = vmatpush1.msra.mxu0 0.0
        %743 = vmatprep.subr.mxu0 0.0
        %744 = vmatpush1.msra.mxu0 0.0
        %745 = vmatprep.subr.mxu0 0.0
        %746 = vmatpush1.msra.mxu0 0.0
        %747 = vmatprep.subr.mxu0 0.0
        %748 = vmatpush1.msra.mxu0 0.0
        %749 = vmatprep.subr.mxu0 0.0
        %750 = vmatpush1.msra.mxu0 0.0
        %751 = vmatprep.subr.mxu0 0.0
        %752 = vmatpush1.msra.mxu0 0.0
        %753 = vmatprep.subr.mxu0 0.0
        %754 = vmatpush1.msra.mxu0 0.0
        %755 = vmatprep.subr.mxu0 0.0
        %756 = vmatpush1.msra.mxu0 0.0
        %757 = vmatprep.subr.mxu0 0.0
        %758 = vmatpush1.msra.mxu0 0.0
        %759 = vmatprep.subr.mxu0 0.0
        %760 = vmatpush1.msra.mxu0 0.0
        %761 = vmatprep.subr.mxu0 0.0
        %762 = vmatpush1.msra.mxu0 0.0
        %763 = vmatprep.subr.mxu0 0.0
        %764 = vmatpush1.msra.mxu0 0.0
        %765 = vmatprep.subr.mxu0 0.0
        %766 = vmatpush1.msra.mxu0 0.0
        %767 = vmatprep.subr.mxu0 0.0
        %768 = vmatpush1.msra.mxu0 0.0
        %769 = vmatprep.subr.mxu0 0.0
        %770 = vmatpush1.msra.mxu0 0.0
        %771 = vmatprep.subr.mxu0 0.0
        %772 = vmatpush1.msra.mxu0 0.0
        %773 = vmatprep.subr.mxu0 0.0
        %774 = vmatpush1.msra.mxu0 0.0
        %775 = vmatprep.subr.mxu0 0.0
        %776 = vmatpush1.msra.mxu0 0.0
        %777 = vmatprep.subr.mxu0 0.0
        %778 = vmatpush1.msra.mxu0 0.0
        %779 = vmatprep.subr.mxu0 0.0
        %780 = vmatpush1.msra.mxu0 0.0
        %781 = vmatprep.subr.mxu0 0.0
        %782 = vmatpush1.msra.mxu0 0.0
        %783 = vmatprep.mubr.f32.mxu0 0.0
        %v784 = vand.u32 %v303, 4294901760
        %785 = vmatmul.mubr.f32.gmra.mrb[0].mxu0 %v784
        %v786 = vpop.f32.mrb[0].mxu0
        %v787 = vadd.f32 %v712, %v786
        %v788 = vpop.f32.mrb[0].mxu0
        %789 = vdwg.mxu0
        %vm790 = vcmask 130048
        %v792 = vsel %vm790, %v292, 0
        %794 = vmatprep.subr.mxu0 0.0
        %v795 = vand.u32 %v295, 4294901760
        %796 = vmatpush1.msra.mxu0 %v795
        %797 = vmatprep.subr.mxu0 0.0
        %v798 = vand.u32 %v296, 4294901760
        %799 = vmatpush1.msra.mxu0 %v798
        %800 = vmatprep.subr.mxu0 0.0
        %801 = vmatpush1.msra.mxu0 0.0
        %802 = vmatprep.subr.mxu0 0.0
        %803 = vmatpush1.msra.mxu0 0.0
        %804 = vmatprep.subr.mxu0 0.0
        %805 = vmatpush1.msra.mxu0 0.0
        %806 = vmatprep.subr.mxu0 0.0
        %807 = vmatpush1.msra.mxu0 0.0
        %808 = vmatprep.subr.mxu0 0.0
        %809 = vmatpush1.msra.mxu0 0.0
        %810 = vmatprep.subr.mxu0 0.0
        %811 = vmatpush1.msra.mxu0 0.0
        %812 = vmatprep.subr.mxu0 0.0
        %813 = vmatpush1.msra.mxu0 0.0
        %814 = vmatprep.subr.mxu0 0.0
        %815 = vmatpush1.msra.mxu0 0.0
        %816 = vmatprep.subr.mxu0 0.0
        %817 = vmatpush1.msra.mxu0 0.0
        %818 = vmatprep.subr.mxu0 0.0
        %819 = vmatpush1.msra.mxu0 0.0
        %820 = vmatprep.subr.mxu0 0.0
        %821 = vmatpush1.msra.mxu0 0.0
        %822 = vmatprep.subr.mxu0 0.0
        %823 = vmatpush1.msra.mxu0 0.0
        %824 = vmatprep.subr.mxu0 0.0
        %825 = vmatpush1.msra.mxu0 0.0
        %826 = vmatprep.subr.mxu0 0.0
        %827 = vmatpush1.msra.mxu0 0.0
        %828 = vmatprep.subr.mxu0 0.0
        %829 = vmatpush1.msra.mxu0 0.0
        %830 = vmatprep.subr.mxu0 0.0
        %831 = vmatpush1.msra.mxu0 0.0
        %832 = vmatprep.subr.mxu0 0.0
        %833 = vmatpush1.msra.mxu0 0.0
        %834 = vmatprep.subr.mxu0 0.0
        %835 = vmatpush1.msra.mxu0 0.0
        %836 = vmatprep.subr.mxu0 0.0
        %837 = vmatpush1.msra.mxu0 0.0
        %838 = vmatprep.subr.mxu0 0.0
        %839 = vmatpush1.msra.mxu0 0.0
        %840 = vmatprep.subr.mxu0 0.0
        %841 = vmatpush1.msra.mxu0 0.0
        %842 = vmatprep.subr.mxu0 0.0
        %843 = vmatpush1.msra.mxu0 0.0
        %844 = vmatprep.subr.mxu0 0.0
        %845 = vmatpush1.msra.mxu0 0.0
        %846 = vmatprep.subr.mxu0 0.0
        %847 = vmatpush1.msra.mxu0 0.0
        %848 = vmatprep.subr.mxu0 0.0
        %849 = vmatpush1.msra.mxu0 0.0
        %850 = vmatprep.subr.mxu0 0.0
        %851 = vmatpush1.msra.mxu0 0.0
        %852 = vmatprep.subr.mxu0 0.0
        %853 = vmatpush1.msra.mxu0 0.0
        %854 = vmatprep.subr.mxu0 0.0
        %855 = vmatpush1.msra.mxu0 0.0
        %856 = vmatprep.subr.mxu0 0.0
        %857 = vmatpush1.msra.mxu0 0.0
        %858 = vmatprep.subr.mxu0 0.0
        %859 = vmatpush1.msra.mxu0 0.0
        %860 = vmatprep.mubr.f32.mxu0 0.0
        %v861 = vand.u32 %v792, 4294901760
        %v862 = vsub.f32 %v792, %v861
        %v863 = vand.u32 %v862, 4294901760
        %v864 = vsub.f32 %v862, %v863
        %v865 = vand.u32 %v864, 4294901760
        %866 = vmatmul.mubr.f32.gmra.mrb[0].mxu0 %v865
        %v867 = vpop.f32.mrb[0].mxu0
        %v868 = vadd.f32 %v787, %v867
        %v869 = vpop.f32.mrb[0].mxu0
        %870 = vdwg.mxu0
        %871 = vmatprep.subr.mxu0 0.0
        %v872 = vand.u32 %v295, 4294901760
        %v873 = vsub.f32 %v295, %v872
        %v874 = vand.u32 %v873, 4294901760
        %v875 = vsub.f32 %v873, %v874
        %v876 = vand.u32 %v875, 4294901760
        %877 = vmatpush1.msra.mxu0 %v876
        %878 = vmatprep.subr.mxu0 0.0
        %v879 = vand.u32 %v296, 4294901760
        %v880 = vsub.f32 %v296, %v879
        %v881 = vand.u32 %v880, 4294901760
        %v882 = vsub.f32 %v880, %v881
        %v883 = vand.u32 %v882, 4294901760
        %884 = vmatpush1.msra.mxu0 %v883
        %885 = vmatprep.subr.mxu0 0.0
        %886 = vmatpush1.msra.mxu0 0.0
        %887 = vmatprep.subr.mxu0 0.0
        %888 = vmatpush1.msra.mxu0 0.0
        %889 = vmatprep.subr.mxu0 0.0
        %890 = vmatpush1.msra.mxu0 0.0
        %891 = vmatprep.subr.mxu0 0.0
        %892 = vmatpush1.msra.mxu0 0.0
        %893 = vmatprep.subr.mxu0 0.0
        %894 = vmatpush1.msra.mxu0 0.0
        %895 = vmatprep.subr.mxu0 0.0
        %896 = vmatpush1.msra.mxu0 0.0
        %897 = vmatprep.subr.mxu0 0.0
        %898 = vmatpush1.msra.mxu0 0.0
        %899 = vmatprep.subr.mxu0 0.0
        %900 = vmatpush1.msra.mxu0 0.0
        %901 = vmatprep.subr.mxu0 0.0
        %902 = vmatpush1.msra.mxu0 0.0
        %903 = vmatprep.subr.mxu0 0.0
        %904 = vmatpush1.msra.mxu0 0.0
        %905 = vmatprep.subr.mxu0 0.0
        %906 = vmatpush1.msra.mxu0 0.0
        %907 = vmatprep.subr.mxu0 0.0
        %908 = vmatpush1.msra.mxu0 0.0
        %909 = vmatprep.subr.mxu0 0.0
        %910 = vmatpush1.msra.mxu0 0.0
        %911 = vmatprep.subr.mxu0 0.0
        %912 = vmatpush1.msra.mxu0 0.0
        %913 = vmatprep.subr.mxu0 0.0
        %914 = vmatpush1.msra.mxu0 0.0
        %915 = vmatprep.subr.mxu0 0.0
        %916 = vmatpush1.msra.mxu0 0.0
        %917 = vmatprep.subr.mxu0 0.0
        %918 = vmatpush1.msra.mxu0 0.0
        %919 = vmatprep.subr.mxu0 0.0
        %920 = vmatpush1.msra.mxu0 0.0
        %921 = vmatprep.subr.mxu0 0.0
        %922 = vmatpush1.msra.mxu0 0.0
        %923 = vmatprep.subr.mxu0 0.0
        %924 = vmatpush1.msra.mxu0 0.0
        %925 = vmatprep.subr.mxu0 0.0
        %926 = vmatpush1.msra.mxu0 0.0
        %927 = vmatprep.subr.mxu0 0.0
        %928 = vmatpush1.msra.mxu0 0.0
        %929 = vmatprep.subr.mxu0 0.0
        %930 = vmatpush1.msra.mxu0 0.0
        %931 = vmatprep.subr.mxu0 0.0
        %932 = vmatpush1.msra.mxu0 0.0
        %933 = vmatprep.subr.mxu0 0.0
        %934 = vmatpush1.msra.mxu0 0.0
        %935 = vmatprep.subr.mxu0 0.0
        %936 = vmatpush1.msra.mxu0 0.0
        %937 = vmatprep.subr.mxu0 0.0
        %938 = vmatpush1.msra.mxu0 0.0
        %939 = vmatprep.subr.mxu0 0.0
        %940 = vmatpush1.msra.mxu0 0.0
        %941 = vmatprep.subr.mxu0 0.0
        %942 = vmatpush1.msra.mxu0 0.0
        %943 = vmatprep.subr.mxu0 0.0
        %944 = vmatpush1.msra.mxu0 0.0
        %945 = vmatprep.mubr.f32.mxu0 0.0
        %v946 = vand.u32 %v792, 4294901760
        %947 = vmatmul.mubr.f32.gmra.mrb[0].mxu0 %v946
        %v948 = vpop.f32.mrb[0].mxu0
        %v949 = vadd.f32 %v868, %v948
        %v950 = vpop.f32.mrb[0].mxu0
        %951 = vdwg.mxu0
        %952 = vmatprep.subr.mxu0 0.0
        %v953 = vand.u32 %v295, 4294901760
        %v954 = vsub.f32 %v295, %v953
        %955 = vmatpush1.msra.mxu0 %v954
        %956 = vmatprep.subr.mxu0 0.0
        %v957 = vand.u32 %v296, 4294901760
        %v958 = vsub.f32 %v296, %v957
        %959 = vmatpush1.msra.mxu0 %v958
        %960 = vmatprep.subr.mxu0 0.0
        %961 = vmatpush1.msra.mxu0 0.0
        %962 = vmatprep.subr.mxu0 0.0
        %963 = vmatpush1.msra.mxu0 0.0
        %964 = vmatprep.subr.mxu0 0.0
        %965 = vmatpush1.msra.mxu0 0.0
        %966 = vmatprep.subr.mxu0 0.0
        %967 = vmatpush1.msra.mxu0 0.0
        %968 = vmatprep.subr.mxu0 0.0
        %969 = vmatpush1.msra.mxu0 0.0
        %970 = vmatprep.subr.mxu0 0.0
        %971 = vmatpush1.msra.mxu0 0.0
        %972 = vmatprep.subr.mxu0 0.0
        %973 = vmatpush1.msra.mxu0 0.0
        %974 = vmatprep.subr.mxu0 0.0
        %975 = vmatpush1.msra.mxu0 0.0
        %976 = vmatprep.subr.mxu0 0.0
        %977 = vmatpush1.msra.mxu0 0.0
        %978 = vmatprep.subr.mxu0 0.0
        %979 = vmatpush1.msra.mxu0 0.0
        %980 = vmatprep.subr.mxu0 0.0
        %981 = vmatpush1.msra.mxu0 0.0
        %982 = vmatprep.subr.mxu0 0.0
        %983 = vmatpush1.msra.mxu0 0.0
        %984 = vmatprep.subr.mxu0 0.0
        %985 = vmatpush1.msra.mxu0 0.0
        %986 = vmatprep.subr.mxu0 0.0
        %987 = vmatpush1.msra.mxu0 0.0
        %988 = vmatprep.subr.mxu0 0.0
        %989 = vmatpush1.msra.mxu0 0.0
        %990 = vmatprep.subr.mxu0 0.0
        %991 = vmatpush1.msra.mxu0 0.0
        %992 = vmatprep.subr.mxu0 0.0
        %993 = vmatpush1.msra.mxu0 0.0
        %994 = vmatprep.subr.mxu0 0.0
        %995 = vmatpush1.msra.mxu0 0.0
        %996 = vmatprep.subr.mxu0 0.0
        %997 = vmatpush1.msra.mxu0 0.0
        %998 = vmatprep.subr.mxu0 0.0
        %999 = vmatpush1.msra.mxu0 0.0
        %1000 = vmatprep.subr.mxu0 0.0
        %1001 = vmatpush1.msra.mxu0 0.0
        %1002 = vmatprep.subr.mxu0 0.0
        %1003 = vmatpush1.msra.mxu0 0.0
        %1004 = vmatprep.subr.mxu0 0.0
        %1005 = vmatpush1.msra.mxu0 0.0
        %1006 = vmatprep.subr.mxu0 0.0
        %1007 = vmatpush1.msra.mxu0 0.0
        %1008 = vmatprep.subr.mxu0 0.0
        %1009 = vmatpush1.msra.mxu0 0.0
        %1010 = vmatprep.subr.mxu0 0.0
        %1011 = vmatpush1.msra.mxu0 0.0
        %1012 = vmatprep.subr.mxu0 0.0
        %1013 = vmatpush1.msra.mxu0 0.0
        %1014 = vmatprep.subr.mxu0 0.0
        %1015 = vmatpush1.msra.mxu0 0.0
        %1016 = vmatprep.subr.mxu0 0.0
        %1017 = vmatpush1.msra.mxu0 0.0
        %1018 = vmatprep.subr.mxu0 0.0
        %1019 = vmatpush1.msra.mxu0 0.0
        %1020 = vmatprep.mubr.f32.mxu0 0.0
        %v1021 = vand.u32 %v792, 4294901760
        %v1022 = vsub.f32 %v792, %v1021
        %1023 = vmatmul.mubr.f32.gmra.mrb[0].mxu0 %v1022
        %v1024 = vpop.f32.mrb[0].mxu0
        %v1025 = vadd.f32 %v949, %v1024
        %v1026 = vpop.f32.mrb[0].mxu0
        %1027 = vdwg.mxu0
        %1028 = vmatprep.subr.mxu0 0.0
        %v1029 = vand.u32 %v295, 4294901760
        %1030 = vmatpush1.msra.mxu0 %v1029
        %1031 = vmatprep.subr.mxu0 0.0
        %v1032 = vand.u32 %v296, 4294901760
        %1033 = vmatpush1.msra.mxu0 %v1032
        %1034 = vmatprep.subr.mxu0 0.0
        %1035 = vmatpush1.msra.mxu0 0.0
        %1036 = vmatprep.subr.mxu0 0.0
        %1037 = vmatpush1.msra.mxu0 0.0
        %1038 = vmatprep.subr.mxu0 0.0
        %1039 = vmatpush1.msra.mxu0 0.0
        %1040 = vmatprep.subr.mxu0 0.0
        %1041 = vmatpush1.msra.mxu0 0.0
        %1042 = vmatprep.subr.mxu0 0.0
        %1043 = vmatpush1.msra.mxu0 0.0
        %1044 = vmatprep.subr.mxu0 0.0
        %1045 = vmatpush1.msra.mxu0 0.0
        %1046 = vmatprep.subr.mxu0 0.0
        %1047 = vmatpush1.msra.mxu0 0.0
        %1048 = vmatprep.subr.mxu0 0.0
        %1049 = vmatpush1.msra.mxu0 0.0
        %1050 = vmatprep.subr.mxu0 0.0
        %1051 = vmatpush1.msra.mxu0 0.0
        %1052 = vmatprep.subr.mxu0 0.0
        %1053 = vmatpush1.msra.mxu0 0.0
        %1054 = vmatprep.subr.mxu0 0.0
        %1055 = vmatpush1.msra.mxu0 0.0
        %1056 = vmatprep.subr.mxu0 0.0
        %1057 = vmatpush1.msra.mxu0 0.0
        %1058 = vmatprep.subr.mxu0 0.0
        %1059 = vmatpush1.msra.mxu0 0.0
        %1060 = vmatprep.subr.mxu0 0.0
        %1061 = vmatpush1.msra.mxu0 0.0
        %1062 = vmatprep.subr.mxu0 0.0
        %1063 = vmatpush1.msra.mxu0 0.0
        %1064 = vmatprep.subr.mxu0 0.0
        %1065 = vmatpush1.msra.mxu0 0.0
        %1066 = vmatprep.subr.mxu0 0.0
        %1067 = vmatpush1.msra.mxu0 0.0
        %1068 = vmatprep.subr.mxu0 0.0
        %1069 = vmatpush1.msra.mxu0 0.0
        %1070 = vmatprep.subr.mxu0 0.0
        %1071 = vmatpush1.msra.mxu0 0.0
        %1072 = vmatprep.subr.mxu0 0.0
        %1073 = vmatpush1.msra.mxu0 0.0
        %1074 = vmatprep.subr.mxu0 0.0
        %1075 = vmatpush1.msra.mxu0 0.0
        %1076 = vmatprep.subr.mxu0 0.0
        %1077 = vmatpush1.msra.mxu0 0.0
        %1078 = vmatprep.subr.mxu0 0.0
        %1079 = vmatpush1.msra.mxu0 0.0
        %1080 = vmatprep.subr.mxu0 0.0
        %1081 = vmatpush1.msra.mxu0 0.0
        %1082 = vmatprep.subr.mxu0 0.0
        %1083 = vmatpush1.msra.mxu0 0.0
        %1084 = vmatprep.subr.mxu0 0.0
        %1085 = vmatpush1.msra.mxu0 0.0
        %1086 = vmatprep.subr.mxu0 0.0
        %1087 = vmatpush1.msra.mxu0 0.0
        %1088 = vmatprep.subr.mxu0 0.0
        %1089 = vmatpush1.msra.mxu0 0.0
        %1090 = vmatprep.subr.mxu0 0.0
        %1091 = vmatpush1.msra.mxu0 0.0
        %1092 = vmatprep.subr.mxu0 0.0
        %1093 = vmatpush1.msra.mxu0 0.0
        %1094 = vmatprep.mubr.f32.mxu0 0.0
        %v1095 = vand.u32 %v792, 4294901760
        %v1096 = vsub.f32 %v792, %v1095
        %v1097 = vand.u32 %v1096, 4294901760
        %1098 = vmatmul.mubr.f32.gmra.mrb[0].mxu0 %v1097
        %v1099 = vpop.f32.mrb[0].mxu0
        %v1100 = vadd.f32 %v1025, %v1099
        %v1101 = vpop.f32.mrb[0].mxu0
        %1102 = vdwg.mxu0
        %1103 = vmatprep.subr.mxu0 0.0
        %v1104 = vand.u32 %v295, 4294901760
        %v1105 = vsub.f32 %v295, %v1104
        %v1106 = vand.u32 %v1105, 4294901760
        %1107 = vmatpush1.msra.mxu0 %v1106
        %1108 = vmatprep.subr.mxu0 0.0
        %v1109 = vand.u32 %v296, 4294901760
        %v1110 = vsub.f32 %v296, %v1109
        %v1111 = vand.u32 %v1110, 4294901760
        %1112 = vmatpush1.msra.mxu0 %v1111
        %1113 = vmatprep.subr.mxu0 0.0
        %1114 = vmatpush1.msra.mxu0 0.0
        %1115 = vmatprep.subr.mxu0 0.0
        %1116 = vmatpush1.msra.mxu0 0.0
        %1117 = vmatprep.subr.mxu0 0.0
        %1118 = vmatpush1.msra.mxu0 0.0
        %1119 = vmatprep.subr.mxu0 0.0
        %1120 = vmatpush1.msra.mxu0 0.0
        %1121 = vmatprep.subr.mxu0 0.0
        %1122 = vmatpush1.msra.mxu0 0.0
        %1123 = vmatprep.subr.mxu0 0.0
        %1124 = vmatpush1.msra.mxu0 0.0
        %1125 = vmatprep.subr.mxu0 0.0
        %1126 = vmatpush1.msra.mxu0 0.0
        %1127 = vmatprep.subr.mxu0 0.0
        %1128 = vmatpush1.msra.mxu0 0.0
        %1129 = vmatprep.subr.mxu0 0.0
        %1130 = vmatpush1.msra.mxu0 0.0
        %1131 = vmatprep.subr.mxu0 0.0
        %1132 = vmatpush1.msra.mxu0 0.0
        %1133 = vmatprep.subr.mxu0 0.0
        %1134 = vmatpush1.msra.mxu0 0.0
        %1135 = vmatprep.subr.mxu0 0.0
        %1136 = vmatpush1.msra.mxu0 0.0
        %1137 = vmatprep.subr.mxu0 0.0
        %1138 = vmatpush1.msra.mxu0 0.0
        %1139 = vmatprep.subr.mxu0 0.0
        %1140 = vmatpush1.msra.mxu0 0.0
        %1141 = vmatprep.subr.mxu0 0.0
        %1142 = vmatpush1.msra.mxu0 0.0
        %1143 = vmatprep.subr.mxu0 0.0
        %1144 = vmatpush1.msra.mxu0 0.0
        %1145 = vmatprep.subr.mxu0 0.0
        %1146 = vmatpush1.msra.mxu0 0.0
        %1147 = vmatprep.subr.mxu0 0.0
        %1148 = vmatpush1.msra.mxu0 0.0
        %1149 = vmatprep.subr.mxu0 0.0
        %1150 = vmatpush1.msra.mxu0 0.0
        %1151 = vmatprep.subr.mxu0 0.0
        %1152 = vmatpush1.msra.mxu0 0.0
        %1153 = vmatprep.subr.mxu0 0.0
        %1154 = vmatpush1.msra.mxu0 0.0
        %1155 = vmatprep.subr.mxu0 0.0
        %1156 = vmatpush1.msra.mxu0 0.0
        %1157 = vmatprep.subr.mxu0 0.0
        %1158 = vmatpush1.msra.mxu0 0.0
        %1159 = vmatprep.subr.mxu0 0.0
        %1160 = vmatpush1.msra.mxu0 0.0
        %1161 = vmatprep.subr.mxu0 0.0
        %1162 = vmatpush1.msra.mxu0 0.0
        %1163 = vmatprep.subr.mxu0 0.0
        %1164 = vmatpush1.msra.mxu0 0.0
        %1165 = vmatprep.subr.mxu0 0.0
        %1166 = vmatpush1.msra.mxu0 0.0
        %1167 = vmatprep.subr.mxu0 0.0
        %1168 = vmatpush1.msra.mxu0 0.0
        %1169 = vmatprep.subr.mxu0 0.0
        %1170 = vmatpush1.msra.mxu0 0.0
        %1171 = vmatprep.subr.mxu0 0.0
        %1172 = vmatpush1.msra.mxu0 0.0
        %1173 = vmatprep.mubr.f32.mxu0 0.0
        %v1174 = vand.u32 %v792, 4294901760
        %1175 = vmatmul.mubr.f32.gmra.mrb[0].mxu0 %v1174
        %v1176 = vpop.f32.mrb[0].mxu0
        %v1177 = vadd.f32 %v1100, %v1176
        %v1178 = vpop.f32.mrb[0].mxu0
        %1179 = vdwg.mxu0
        %1180 = vmatprep.subr.mxu0 0.0
        %v1181 = vand.u32 %v295, 4294901760
        %1182 = vmatpush1.msra.mxu0 %v1181
        %1183 = vmatprep.subr.mxu0 0.0
        %v1184 = vand.u32 %v296, 4294901760
        %1185 = vmatpush1.msra.mxu0 %v1184
        %1186 = vmatprep.subr.mxu0 0.0
        %1187 = vmatpush1.msra.mxu0 0.0
        %1188 = vmatprep.subr.mxu0 0.0
        %1189 = vmatpush1.msra.mxu0 0.0
        %1190 = vmatprep.subr.mxu0 0.0
        %1191 = vmatpush1.msra.mxu0 0.0
        %1192 = vmatprep.subr.mxu0 0.0
        %1193 = vmatpush1.msra.mxu0 0.0
        %1194 = vmatprep.subr.mxu0 0.0
        %1195 = vmatpush1.msra.mxu0 0.0
        %1196 = vmatprep.subr.mxu0 0.0
        %1197 = vmatpush1.msra.mxu0 0.0
        %1198 = vmatprep.subr.mxu0 0.0
        %1199 = vmatpush1.msra.mxu0 0.0
        %1200 = vmatprep.subr.mxu0 0.0
        %1201 = vmatpush1.msra.mxu0 0.0
        %1202 = vmatprep.subr.mxu0 0.0
        %1203 = vmatpush1.msra.mxu0 0.0
        %1204 = vmatprep.subr.mxu0 0.0
        %1205 = vmatpush1.msra.mxu0 0.0
        %1206 = vmatprep.subr.mxu0 0.0
        %1207 = vmatpush1.msra.mxu0 0.0
        %1208 = vmatprep.subr.mxu0 0.0
        %1209 = vmatpush1.msra.mxu0 0.0
        %1210 = vmatprep.subr.mxu0 0.0
        %1211 = vmatpush1.msra.mxu0 0.0
        %1212 = vmatprep.subr.mxu0 0.0
        %1213 = vmatpush1.msra.mxu0 0.0
        %1214 = vmatprep.subr.mxu0 0.0
        %1215 = vmatpush1.msra.mxu0 0.0
        %1216 = vmatprep.subr.mxu0 0.0
        %1217 = vmatpush1.msra.mxu0 0.0
        %1218 = vmatprep.subr.mxu0 0.0
        %1219 = vmatpush1.msra.mxu0 0.0
        %1220 = vmatprep.subr.mxu0 0.0
        %1221 = vmatpush1.msra.mxu0 0.0
        %1222 = vmatprep.subr.mxu0 0.0
        %1223 = vmatpush1.msra.mxu0 0.0
        %1224 = vmatprep.subr.mxu0 0.0
        %1225 = vmatpush1.msra.mxu0 0.0
        %1226 = vmatprep.subr.mxu0 0.0
        %1227 = vmatpush1.msra.mxu0 0.0
        %1228 = vmatprep.subr.mxu0 0.0
        %1229 = vmatpush1.msra.mxu0 0.0
        %1230 = vmatprep.subr.mxu0 0.0
        %1231 = vmatpush1.msra.mxu0 0.0
        %1232 = vmatprep.subr.mxu0 0.0
        %1233 = vmatpush1.msra.mxu0 0.0
        %1234 = vmatprep.subr.mxu0 0.0
        %1235 = vmatpush1.msra.mxu0 0.0
        %1236 = vmatprep.subr.mxu0 0.0
        %1237 = vmatpush1.msra.mxu0 0.0
        %1238 = vmatprep.subr.mxu0 0.0
        %1239 = vmatpush1.msra.mxu0 0.0
        %1240 = vmatprep.subr.mxu0 0.0
        %1241 = vmatpush1.msra.mxu0 0.0
        %1242 = vmatprep.subr.mxu0 0.0
        %1243 = vmatpush1.msra.mxu0 0.0
        %1244 = vmatprep.subr.mxu0 0.0
        %1245 = vmatpush1.msra.mxu0 0.0
        %1246 = vmatprep.mubr.f32.mxu0 0.0
        %v1247 = vand.u32 %v792, 4294901760
        %1248 = vmatmul.mubr.f32.gmra.mrb[0].mxu0 %v1247
        %v1249 = vpop.f32.mrb[0].mxu0
        %v1250 = vadd.f32 %v1177, %v1249
        %v1251 = vpop.f32.mrb[0].mxu0
        %1252 = vdwg.mxu0
        %v1253 = vld [vmem:[#allocation8 + $0x30] sm:$0x1]
        %v1254 = vlaneseq
        %v1255 = vshrl.u32 %v1254, 7
        %v1256 = vsub.s32 0, %v1255
        %v1257 = vrot.slane %v1253, %v1256
        %v1258 = vadd.f32 %v1250, %v1257
        %v1259 = vxor.u32 %v1258, 2147483648
        %v1260 = vmul.f32 %v1259, 1.442695
        %v1261 = vpow.pop %v1260
        %v1262 = vadd.f32 %v1261, 1.0
        %v1263 = vrcp.pop %v1262
        %v1264 = vmul.f32 1.0, %v1263
        %v1265 = vtanh.pop %v1258
        %1267 = vrot.lane.b32.xlu0 %v294, 32
        %v1268 = vpop.permute.xlu0 %1267
        %v1270 = vmul.f32 %v1264, %v1268
        %1272 = vrot.lane.b32.xlu0 %v1265, 64
        %v1273 = vpop.permute.xlu0 %1272
        %v1275 = vmul.f32 %v1264, %v1273
        %1277 = vrot.lane.b32.xlu0 %v1275, 32
        %v1278 = vpop.permute.xlu0 %1277
        %v1280 = vadd.f32 %v1270, %v1278
        %v1281 = vtanh.pop %v1280
        %1283 = vrot.lane.b32.xlu0 %v1281, 64
        %v1284 = vpop.permute.xlu0 %1283
        %v1286 = vmul.f32 %v1264, %v1284
        %1288 = vrot.lane.b32.xlu0 %v1286, 32
        %v1289 = vpop.permute.xlu0 %1288
        %vm1291 = vcmask 254976
        %1292 = vst.msk [vmem:[#allocation2] sm:$0x3] %vm1291, %v1289
        %1294 = vrot.lane.b32.xlu0 %v1280, 96
        %v1295 = vpop.permute.xlu0 %1294
        %1297 = vst.msk [vmem:[#allocation3] sm:$0x3] %vm1291, %v1295
        %1298 = vst.msk [vmem:[#allocation10] sm:$0x3] %vm1291, %v1289
        %s1299 = scalar_lea.vmem [#allocation10], 2
        %1300 = vst.msk [vmem:[%s1299] sm:$0x3] %vm1291, %v1295
        %v1301 = vld [vmem:[%s3] sm:$0x1]
        %v1303 = vlaneseq
        %v1304 = vshrl.u32 %v1303, 7
        %v1305 = vsub.s32 0, %v1304
        %v1306 = vrot.slane %v1301, %v1305
        %1307 = vrot.lane.b32.xlu0 %v1306, 96
        %v1308 = vpop.permute.xlu0 %1307
        %v1310 = vmul.f32 %v1286, %v1308
        %1312 = vrot.lane.b32.xlu0 %v1310, 32
        %v1313 = vpop.permute.xlu0 %1312
        %v1315 = vsel %vm1291, %v1313, 0.0
        %1316 = vadd.xlane.f32.xlu0 %v1315
        %v1317 = vpop.xlane.xlu0 %1316
        %s1318 = sld [smem:[#allocation4]]
        %v1319 = vstv %s1318
        %v1320 = vadd.f32 %v1317, %v1319
        %v1321 = vxor.u32 %v1320, 2147483648
        %v1322 = vmul.f32 %v1321, 1.442695
        %v1323 = vpow.pop %v1322
        %v1324 = vadd.f32 %v1323, 1.0
        %v1325 = vrcp.pop %v1324
        %v1326 = vmul.f32 1.0, %v1325
        %vm1327 = vcmp.gt.f32.partialorder %v1326, 0.5
        %v1328 = vsel %vm1327, 1, 0
        %v1329 = vcvt.s32.f32 %v1328
        %v1330 = vlaneseq
        %v1331 = vand.u32 %v1330, 127
        %vm1332 = vcmp.eq.s32.totalorder %v1331, 0
        %vm1333 = vcmp.eq.s32.totalorder %v1331, 1
        %v1334 = vsel %vm1333, %v1329, 0.0
        %v1335 = vsel %vm1332, %v1326, %v1334
        %1336 = vst [vmem:[%s281] sm:$0x3] %v1335
        %p1337 = scmp.lt.s32.totalorder %s24, 2
        %s1338 = scalar_select %p1337, %s24, 2
        %s1339 = smul.addr %s1338, 2
        %s1340 = scalar_lea.vmem %s5, %s1339
        // Predicated region
        $region53: #{rnn_gate_sequence.1} parent=39 // pred_check
          %p1341 = pneg %p152
        $region54: #{rnn_gate_sequence.1} parent=39 // pred_check_branch
          %1343 = sbr.rel (%p1341) target = $region56
        $region55: #{rnn_gate_sequence.1} parent=39 // pred_region
          _
        $region56: #{rnn_gate_sequence.1} parent=39 // pred_fallthru
          _
        // Predicated region
        $region57: #{rnn_gate_sequence.1} parent=39 // pred_check
          %p1344 = pneg %p173
        $region58: #{rnn_gate_sequence.1} parent=39 // pred_check_branch
          %1346 = sbr.rel (%p1344) target = $region60
        $region59: #{rnn_gate_sequence.1} parent=39 // pred_region
          %s1348 = ssub.s32 64, 64
          %1349 = vsyncadd [#allocation7], %s1348
          %s1350 = sshll.u32 [#allocation10], 4
          %s1351 = int_to_ptr.vmem [resolvable:$true] %s1350
          %1356 = dma.vmem_to_hbm [thread:$0]  %s1351, 64, %s6, [#allocation7], 32, 32, 2
        $region60: #{rnn_gate_sequence.1} parent=39 // pred_fallthru
          _
        // Predicated region
        $region61: #{rnn_gate_sequence.1} parent=39 // pred_check
          %p1357 = pneg %p173
        $region62: #{rnn_gate_sequence.1} parent=39 // pred_check_branch
          %1359 = sbr.rel (%p1357) target = $region64
        $region63: #{rnn_gate_sequence.1} parent=39 // pred_region
          %1360 = dma.done [#allocation7], 64
        $region64: #{rnn_gate_sequence.1} parent=39 // pred_fallthru
          _
      $region40: #{rnn_gate_sequence.1} parent=5 // pred_fallthru
        _
      %p1361 = scmp.le.s32.totalorder 2, %s19
      // Predicated region
      $region65: #{rnn_gate_sequence.1} parent=5 // pred_check
        %p1362 = pneg %p1361
      $region66: #{rnn_gate_sequence.1} parent=5 // pred_check_branch
        %1364 = sbr.rel (%p1362) target = $region68
      $region67: #{rnn_gate_sequence.1} parent=5 // pred_region
        %s1365 = ssub.s32 %s19, 2
        // Predicated region
        $region69: #{rnn_gate_sequence.1} parent=67 // pred_check
          %p1366 = pneg %p158
        $region70: #{rnn_gate_sequence.1} parent=67 // pred_check_branch
          %1368 = sbr.rel (%p1366) target = $region72
        $region71: #{rnn_gate_sequence.1} parent=67 // pred_region
          %p1369 = scmp.lt.s32.totalorder %s25, 2
          %s1370 = scalar_select %p1369, %s25, 2
          %s1371 = smul.addr %s1370, 2
          %s1372 = scalar_lea.vmem %s5, %s1371
        $region72: #{rnn_gate_sequence.1} parent=67 // pred_fallthru
          _
      $region68: #{rnn_gate_sequence.1} parent=5 // pred_fallthru
        _
    $region6: #{rnn_gate_sequence.1} parent=1 // loop_footer
      %s23 = sadd.s32 1, %s19
    $region7: #{rnn_gate_sequence.1} parent=1 // loop_footer_branch
      %18 = sbr.rel target = $region3
    $region8: #{rnn_gate_sequence.1} parent=1 // loop_exit
      _
    %1373 = vsyncpa [#allocation6], 1
    %s1374 = scalar_lea.sflag [#allocation6], 1
    %1375 = vsyncpa %s1374, 1
    %1376 = vsyncpa [#allocation9], 1
    %1377 = vsyncpa [#allocation7], 1
    %s1378 = scalar_lea.sflag [#allocation7], 1
    %1379 = vsyncpa %s1378, 1

</llo_original>
